<compile_context>
chip_gen: v7x
topology: tpu7x:2x2x1
jax: 0.10.0
libtpu: 0.0.40
codegen_flags: <defaults>
</compile_context>

<pallas_src>
import numpy as np
import jax
import jax.numpy as jnp
from jax import lax
from jax.experimental import pallas as pl
from jax.experimental.pallas import tpu as pltpu


def beta_rnn_kernel(x_ref, wihT_ref, whhT_ref, b_ref, v_ref, h0T_ref, out_ref):
    """fbeta (BetaRNN) forward for one M-block, region-lane-dense layout.

    x_ref:    (T, F, Mb)  time-major features, regions on the lane axis
    wihT_ref: (D, F)      input-to-hidden weight, transposed
    whhT_ref: (D, D)      hidden-to-hidden weight, transposed
    b_ref:    (D, 1)      combined RNN bias (column => lane-broadcastable)
    v_ref:    (D, 1)      Linear(D, 1, bias=False) head weight (column)
    h0T_ref:  (D, Mb)     learned initial hidden state, transposed
    out_ref:  (T, Mb)     sigmoid(v . h_t) -- lane-dense output slab
    """
    T = x_ref.shape[0]

    w_ihT = wihT_ref[...]                                    # (D, F)
    w_hhT = whhT_ref[...]                                    # (D, D)
    b = b_ref[...]                                           # (D, 1)
    v = v_ref[...]                                           # (D, 1)

    h = h0T_ref[...]                                         # (D, Mb) in vregs
    logits = []
    for t in range(T):                                       # small static T -> unroll
        # Input projection is independent of h: scheduler overlaps it with the
        # serial h @ W_hh -> tanh chain.
        xw = jnp.dot(w_ihT, x_ref[t], preferred_element_type=jnp.float32)   # (D, Mb)
        hh = jnp.dot(w_hhT, h, preferred_element_type=jnp.float32)          # (D, Mb)
        h = jnp.tanh(xw + hh + b)                                            # (D, Mb)
        # Head: VPU mul + XLU sublane reduce (off the MXU/EUP critical path).
        logits.append(jnp.sum(h * v, axis=0, keepdims=True))                 # (1, Mb)

    # One sigmoid pass + one lane-dense store for the whole block.
    out_ref[...] = jax.nn.sigmoid(jnp.concatenate(logits, axis=0))           # (T, Mb)


def run_fbeta(x, w_ih, w_hh, b, v, h0, *, block_m=128):
    """Runs the BetaRNN over x (T, M, F); returns beta of shape (T, M)."""
    T, M, F = x.shape
    D = w_ih.shape[1]

    n_blk = pl.cdiv(M, block_m)
    Mp = n_blk * block_m

    # Layout plumbing in the wrapper (not compute hoisting): put regions on the
    # lane axis and pad them to a lane-width multiple.
    xT = jnp.transpose(x, (0, 2, 1))                          # (T, F, M)
    h0T = h0.T                                                # (D, M)
    if Mp != M:
        xT = jnp.pad(xT, ((0, 0), (0, 0), (0, Mp - M)))
        h0T = jnp.pad(h0T, ((0, 0), (0, Mp - M)))
    w_ihT = w_ih.T                                            # (D, F)
    w_hhT = w_hh.T                                            # (D, D)
    b_col = b.reshape(D, 1)
    v_col = v.reshape(D, 1)

    cost = pl.CostEstimate(
        flops=2 * T * Mp * (F * D + D * D + D),
        transcendentals=T * Mp * (D + 1),
        bytes_accessed=4 * (xT.size + w_ihT.size + w_hhT.size + b_col.size
                            + v_col.size + h0T.size + T * Mp),
    )

    out = pl.pallas_call(
        beta_rnn_kernel,
        out_shape=jax.ShapeDtypeStruct((T, Mp), jnp.float32),
        grid=(n_blk,),
        in_specs=[
            pl.BlockSpec((T, F, block_m), lambda i: (0, 0, i)),   # x (lane-dense in M)
            pl.BlockSpec((D, F), lambda i: (0, 0)),               # W_ih^T
            pl.BlockSpec((D, D), lambda i: (0, 0)),               # W_hh^T
            pl.BlockSpec((D, 1), lambda i: (0, 0)),               # bias column
            pl.BlockSpec((D, 1), lambda i: (0, 0)),               # head weight column
            pl.BlockSpec((D, block_m), lambda i: (0, i)),         # h0^T
        ],
        out_specs=pl.BlockSpec((T, block_m), lambda i: (0, i)),
        compiler_params=pltpu.CompilerParams(
            dimension_semantics=("parallel",)),                   # megacore on v7x
        cost_estimate=cost,
    )(xT, w_ihT, w_hhT, b_col, v_col, h0T)

    return out[:, :M]                                             # (T, M)


class BetaLatentPallas:
    """JAX/Pallas port of BetaLatent with fbeta = BetaRNN(M, input_dim)."""

    def __init__(self, M, tmax, time_features, hidden_dim, key):
        self.M = M
        self.tmax = tmax
        self.time_features = time_features          # (T_f, M, F)
        F = time_features.shape[2]
        D = hidden_dim
        ks = jax.random.split(key, 5)
        s = 1.0 / np.sqrt(D)
        # Deterministic synthetic parameters (shapes follow nn.RNN / nn.Linear).
        self.w_ih = jax.random.uniform(ks[0], (F, D), jnp.float32, -s, s)
        self.w_hh = jax.random.uniform(ks[1], (D, D), jnp.float32, -s, s)
        b_ih = jax.random.uniform(ks[2], (D,), jnp.float32, -s, s)
        b_hh = jax.random.uniform(ks[3], (D,), jnp.float32, -s, s)
        self.b = (b_ih + b_hh).reshape(1, D)
        self.v = jax.random.uniform(ks[4], (1, D), jnp.float32, -s, s)  # Linear(D,1,bias=False).weight
        self.h0 = jnp.zeros((M, D), jnp.float32)    # nn.Parameter(zeros(1, M, D)) squeezed

    def _build_features(self, t):
        """Replicates the narrow/copy_ padding logic of BetaLatent.forward."""
        T_t = t.shape[0]
        tf = self.time_features
        if tf.shape[0] > T_t:
            f = tf[:T_t]
        else:
            # pad with the last observed timestep, then overwrite the known prefix
            f = jnp.broadcast_to(tf[-1:], (T_t, self.M, tf.shape[2]))
            f = f.at[: tf.shape[0]].set(tf)
        return f                                     # (T_t, M, F) == th.cat([f], dim=2)

    def forward(self, t, ys=None):
        x = self._build_features(t)
        beta = run_fbeta(x, self.w_ih, self.w_hh, self.b, self.v, self.h0)  # (T, M)
        # beta.squeeze().t() in the reference; explicit (M, T) here (avoids the
        # M==1 / T==1 squeeze-all-dims ambiguity of the PyTorch version).
        return beta.T                                # (M, T)


def reference_forward(model, t):
    """Pure-JAX reference (lax.scan) for correctness checking."""
    x = model._build_features(t)

    def step(h, x_t):
        h = jnp.tanh(x_t @ model.w_ih + h @ model.w_hh + model.b)
        beta = jax.nn.sigmoid(h @ model.v.T)         # (M, 1)
        return h, beta[:, 0]

    _, betas = lax.scan(step, model.h0, x)           # (T, M)
    return betas.T                                   # (M, T)


if __name__ == "__main__":
    key = jax.random.PRNGKey(0)
    k_feat, k_param = jax.random.split(key)

    M, F, D = 256, 4, 32         # regions (2 lane-width blocks), feature dim, hidden dim
    T_f, T_t = 6, 8              # observed feature steps < requested steps -> pad branch

    time_features = jax.random.normal(k_feat, (T_f, M, F), jnp.float32)
    t = jnp.arange(T_t, dtype=jnp.float32)
    ys = jnp.zeros((T_t, M), jnp.float32)            # unused by forward (matches PyTorch)

    model = BetaLatentPallas(M, tmax=float(T_t), time_features=time_features,
                             hidden_dim=D, key=k_param)

    beta = model.forward(t, ys)
    beta = jax.block_until_ready(beta)               # (M, T_t)

    ref = jax.block_until_ready(reference_forward(model, t))
    assert beta.shape == (M, T_t), beta.shape
    np.testing.assert_allclose(np.asarray(beta), np.asarray(ref), rtol=1e-5, atol=1e-5)

    print("KERNEL_OK")
</pallas_src>

<mosaic_0001>
module attributes {stable_mosaic.version = 11 : i64} {
  func.func @beta_rnn_kernel(%arg0: i32, %arg1: memref<8x4x128xf32, #tpu.memory_space<vmem>>, %arg2: memref<32x4xf32, #tpu.memory_space<vmem>>, %arg3: memref<32x32xf32, #tpu.memory_space<vmem>>, %arg4: memref<32x1xf32, #tpu.memory_space<vmem>>, %arg5: memref<32x1xf32, #tpu.memory_space<vmem>>, %arg6: memref<32x128xf32, #tpu.memory_space<vmem>>, %arg7: memref<8x128xf32, #tpu.memory_space<vmem>>) attributes {dimension_semantics = [#tpu.dimension_semantics<parallel>], iteration_bounds = array<i64: 2>, scalar_prefetch = 0 : i64, scratch_operands = 0 : i64, tpu.core_type = #tpu.core_type<tc>, window_params = [{transform_indices = @transform_0, window_bounds = array<i64: 8, 4, 128>}, {pipeline_mode = #tpu.pipeline_mode<synchronous>, transform_indices = @transform_1, window_bounds = array<i64: 32, 4>}, {pipeline_mode = #tpu.pipeline_mode<synchronous>, transform_indices = @transform_2, window_bounds = array<i64: 32, 32>}, {pipeline_mode = #tpu.pipeline_mode<synchronous>, transform_indices = @transform_3, window_bounds = array<i64: 32, 1>}, {pipeline_mode = #tpu.pipeline_mode<synchronous>, transform_indices = @transform_4, window_bounds = array<i64: 32, 1>}, {transform_indices = @transform_5, window_bounds = array<i64: 32, 128>}, {transform_indices = @transform_6, window_bounds = array<i64: 8, 128>}]} {
    %c0 = arith.constant 0 : index
    %c0_0 = arith.constant 0 : index
    %0 = vector.load %arg2[%c0, %c0_0] : memref<32x4xf32, #tpu.memory_space<vmem>>, vector<32x4xf32>
    %c0_1 = arith.constant 0 : index
    %c0_2 = arith.constant 0 : index
    %1 = vector.load %arg3[%c0_1, %c0_2] : memref<32x32xf32, #tpu.memory_space<vmem>>, vector<32x32xf32>
    %c0_3 = arith.constant 0 : index
    %c0_4 = arith.constant 0 : index
    %2 = vector.load %arg4[%c0_3, %c0_4] : memref<32x1xf32, #tpu.memory_space<vmem>>, vector<32x1xf32>
    %c0_5 = arith.constant 0 : index
    %c0_6 = arith.constant 0 : index
    %3 = vector.load %arg5[%c0_5, %c0_6] : memref<32x1xf32, #tpu.memory_space<vmem>>, vector<32x1xf32>
    %c0_7 = arith.constant 0 : index
    %c0_8 = arith.constant 0 : index
    %4 = vector.load %arg6[%c0_7, %c0_8] : memref<32x128xf32, #tpu.memory_space<vmem>>, vector<32x128xf32>
    %c0_9 = arith.constant 0 : index
    %c0_10 = arith.constant 0 : index
    %c0_11 = arith.constant 0 : index
    %5 = vector.load %arg1[%c0_9, %c0_10, %c0_11] : memref<8x4x128xf32, #tpu.memory_space<vmem>>, vector<1x4x128xf32>
    %6 = vector.shape_cast %5 : vector<1x4x128xf32> to vector<4x128xf32>
    %cst = arith.constant dense<0.000000e+00> : vector<32x128xf32>
    %7 = tpu.matmul %0, %6, %cst {dimension_numbers = #tpu.dot_dimension_numbers<[1], [0], [0], [1], [0, 0, 1, 1], [], []>} : vector<32x4xf32>, vector<4x128xf32>, vector<32x128xf32> -> vector<32x128xf32>
    %cst_12 = arith.constant dense<0.000000e+00> : vector<32x128xf32>
    %8 = tpu.matmul %1, %4, %cst_12 {dimension_numbers = #tpu.dot_dimension_numbers<[1], [0], [0], [1], [0, 0, 1, 1], [], []>} : vector<32x32xf32>, vector<32x128xf32>, vector<32x128xf32> -> vector<32x128xf32>
    %9 = arith.addf %7, %8 : vector<32x128xf32>
    %10 = vector.broadcast %2 : vector<32x1xf32> to vector<32x128xf32>
    %11 = arith.addf %9, %10 : vector<32x128xf32>
    %12 = math.tanh %11 : vector<32x128xf32>
    %13 = vector.broadcast %3 : vector<32x1xf32> to vector<32x128xf32>
    %14 = arith.mulf %12, %13 : vector<32x128xf32>
    %cst_13 = arith.constant dense<0.000000e+00> : vector<128xf32>
    %15 = vector.multi_reduction <add>, %14, %cst_13 [0] : vector<32x128xf32> to vector<128xf32>
    %16 = vector.shape_cast %15 : vector<128xf32> to vector<1x128xf32>
    %c1 = arith.constant 1 : index
    %c0_14 = arith.constant 0 : index
    %c0_15 = arith.constant 0 : index
    %17 = vector.load %arg1[%c1, %c0_14, %c0_15] : memref<8x4x128xf32, #tpu.memory_space<vmem>>, vector<1x4x128xf32>
    %18 = vector.shape_cast %17 : vector<1x4x128xf32> to vector<4x128xf32>
    %cst_16 = arith.constant dense<0.000000e+00> : vector<32x128xf32>
    %19 = tpu.matmul %0, %18, %cst_16 {dimension_numbers = #tpu.dot_dimension_numbers<[1], [0], [0], [1], [0, 0, 1, 1], [], []>} : vector<32x4xf32>, vector<4x128xf32>, vector<32x128xf32> -> vector<32x128xf32>
    %cst_17 = arith.constant dense<0.000000e+00> : vector<32x128xf32>
    %20 = tpu.matmul %1, %12, %cst_17 {dimension_numbers = #tpu.dot_dimension_numbers<[1], [0], [0], [1], [0, 0, 1, 1], [], []>} : vector<32x32xf32>, vector<32x128xf32>, vector<32x128xf32> -> vector<32x128xf32>
    %21 = arith.addf %19, %20 : vector<32x128xf32>
    %22 = vector.broadcast %2 : vector<32x1xf32> to vector<32x128xf32>
    %23 = arith.addf %21, %22 : vector<32x128xf32>
    %24 = math.tanh %23 : vector<32x128xf32>
    %25 = vector.broadcast %3 : vector<32x1xf32> to vector<32x128xf32>
    %26 = arith.mulf %24, %25 : vector<32x128xf32>
    %cst_18 = arith.constant dense<0.000000e+00> : vector<128xf32>
    %27 = vector.multi_reduction <add>, %26, %cst_18 [0] : vector<32x128xf32> to vector<128xf32>
    %28 = vector.shape_cast %27 : vector<128xf32> to vector<1x128xf32>
    %c2 = arith.constant 2 : index
    %c0_19 = arith.constant 0 : index
    %c0_20 = arith.constant 0 : index
    %29 = vector.load %arg1[%c2, %c0_19, %c0_20] : memref<8x4x128xf32, #tpu.memory_space<vmem>>, vector<1x4x128xf32>
    %30 = vector.shape_cast %29 : vector<1x4x128xf32> to vector<4x128xf32>
    %cst_21 = arith.constant dense<0.000000e+00> : vector<32x128xf32>
    %31 = tpu.matmul %0, %30, %cst_21 {dimension_numbers = #tpu.dot_dimension_numbers<[1], [0], [0], [1], [0, 0, 1, 1], [], []>} : vector<32x4xf32>, vector<4x128xf32>, vector<32x128xf32> -> vector<32x128xf32>
    %cst_22 = arith.constant dense<0.000000e+00> : vector<32x128xf32>
    %32 = tpu.matmul %1, %24, %cst_22 {dimension_numbers = #tpu.dot_dimension_numbers<[1], [0], [0], [1], [0, 0, 1, 1], [], []>} : vector<32x32xf32>, vector<32x128xf32>, vector<32x128xf32> -> vector<32x128xf32>
    %33 = arith.addf %31, %32 : vector<32x128xf32>
    %34 = vector.broadcast %2 : vector<32x1xf32> to vector<32x128xf32>
    %35 = arith.addf %33, %34 : vector<32x128xf32>
    %36 = math.tanh %35 : vector<32x128xf32>
    %37 = vector.broadcast %3 : vector<32x1xf32> to vector<32x128xf32>
    %38 = arith.mulf %36, %37 : vector<32x128xf32>
    %cst_23 = arith.constant dense<0.000000e+00> : vector<128xf32>
    %39 = vector.multi_reduction <add>, %38, %cst_23 [0] : vector<32x128xf32> to vector<128xf32>
    %40 = vector.shape_cast %39 : vector<128xf32> to vector<1x128xf32>
    %c3 = arith.constant 3 : index
    %c0_24 = arith.constant 0 : index
    %c0_25 = arith.constant 0 : index
    %41 = vector.load %arg1[%c3, %c0_24, %c0_25] : memref<8x4x128xf32, #tpu.memory_space<vmem>>, vector<1x4x128xf32>
    %42 = vector.shape_cast %41 : vector<1x4x128xf32> to vector<4x128xf32>
    %cst_26 = arith.constant dense<0.000000e+00> : vector<32x128xf32>
    %43 = tpu.matmul %0, %42, %cst_26 {dimension_numbers = #tpu.dot_dimension_numbers<[1], [0], [0], [1], [0, 0, 1, 1], [], []>} : vector<32x4xf32>, vector<4x128xf32>, vector<32x128xf32> -> vector<32x128xf32>
    %cst_27 = arith.constant dense<0.000000e+00> : vector<32x128xf32>
    %44 = tpu.matmul %1, %36, %cst_27 {dimension_numbers = #tpu.dot_dimension_numbers<[1], [0], [0], [1], [0, 0, 1, 1], [], []>} : vector<32x32xf32>, vector<32x128xf32>, vector<32x128xf32> -> vector<32x128xf32>
    %45 = arith.addf %43, %44 : vector<32x128xf32>
    %46 = vector.broadcast %2 : vector<32x1xf32> to vector<32x128xf32>
    %47 = arith.addf %45, %46 : vector<32x128xf32>
    %48 = math.tanh %47 : vector<32x128xf32>
    %49 = vector.broadcast %3 : vector<32x1xf32> to vector<32x128xf32>
    %50 = arith.mulf %48, %49 : vector<32x128xf32>
    %cst_28 = arith.constant dense<0.000000e+00> : vector<128xf32>
    %51 = vector.multi_reduction <add>, %50, %cst_28 [0] : vector<32x128xf32> to vector<128xf32>
    %52 = vector.shape_cast %51 : vector<128xf32> to vector<1x128xf32>
    %c4 = arith.constant 4 : index
    %c0_29 = arith.constant 0 : index
    %c0_30 = arith.constant 0 : index
    %53 = vector.load %arg1[%c4, %c0_29, %c0_30] : memref<8x4x128xf32, #tpu.memory_space<vmem>>, vector<1x4x128xf32>
    %54 = vector.shape_cast %53 : vector<1x4x128xf32> to vector<4x128xf32>
    %cst_31 = arith.constant dense<0.000000e+00> : vector<32x128xf32>
    %55 = tpu.matmul %0, %54, %cst_31 {dimension_numbers = #tpu.dot_dimension_numbers<[1], [0], [0], [1], [0, 0, 1, 1], [], []>} : vector<32x4xf32>, vector<4x128xf32>, vector<32x128xf32> -> vector<32x128xf32>
    %cst_32 = arith.constant dense<0.000000e+00> : vector<32x128xf32>
    %56 = tpu.matmul %1, %48, %cst_32 {dimension_numbers = #tpu.dot_dimension_numbers<[1], [0], [0], [1], [0, 0, 1, 1], [], []>} : vector<32x32xf32>, vector<32x128xf32>, vector<32x128xf32> -> vector<32x128xf32>
    %57 = arith.addf %55, %56 : vector<32x128xf32>
    %58 = vector.broadcast %2 : vector<32x1xf32> to vector<32x128xf32>
    %59 = arith.addf %57, %58 : vector<32x128xf32>
    %60 = math.tanh %59 : vector<32x128xf32>
    %61 = vector.broadcast %3 : vector<32x1xf32> to vector<32x128xf32>
    %62 = arith.mulf %60, %61 : vector<32x128xf32>
    %cst_33 = arith.constant dense<0.000000e+00> : vector<128xf32>
    %63 = vector.multi_reduction <add>, %62, %cst_33 [0] : vector<32x128xf32> to vector<128xf32>
    %64 = vector.shape_cast %63 : vector<128xf32> to vector<1x128xf32>
    %c5 = arith.constant 5 : index
    %c0_34 = arith.constant 0 : index
    %c0_35 = arith.constant 0 : index
    %65 = vector.load %arg1[%c5, %c0_34, %c0_35] : memref<8x4x128xf32, #tpu.memory_space<vmem>>, vector<1x4x128xf32>
    %66 = vector.shape_cast %65 : vector<1x4x128xf32> to vector<4x128xf32>
    %cst_36 = arith.constant dense<0.000000e+00> : vector<32x128xf32>
    %67 = tpu.matmul %0, %66, %cst_36 {dimension_numbers = #tpu.dot_dimension_numbers<[1], [0], [0], [1], [0, 0, 1, 1], [], []>} : vector<32x4xf32>, vector<4x128xf32>, vector<32x128xf32> -> vector<32x128xf32>
    %cst_37 = arith.constant dense<0.000000e+00> : vector<32x128xf32>
    %68 = tpu.matmul %1, %60, %cst_37 {dimension_numbers = #tpu.dot_dimension_numbers<[1], [0], [0], [1], [0, 0, 1, 1], [], []>} : vector<32x32xf32>, vector<32x128xf32>, vector<32x128xf32> -> vector<32x128xf32>
    %69 = arith.addf %67, %68 : vector<32x128xf32>
    %70 = vector.broadcast %2 : vector<32x1xf32> to vector<32x128xf32>
    %71 = arith.addf %69, %70 : vector<32x128xf32>
    %72 = math.tanh %71 : vector<32x128xf32>
    %73 = vector.broadcast %3 : vector<32x1xf32> to vector<32x128xf32>
    %74 = arith.mulf %72, %73 : vector<32x128xf32>
    %cst_38 = arith.constant dense<0.000000e+00> : vector<128xf32>
    %75 = vector.multi_reduction <add>, %74, %cst_38 [0] : vector<32x128xf32> to vector<128xf32>
    %76 = vector.shape_cast %75 : vector<128xf32> to vector<1x128xf32>
    %c6 = arith.constant 6 : index
    %c0_39 = arith.constant 0 : index
    %c0_40 = arith.constant 0 : index
    %77 = vector.load %arg1[%c6, %c0_39, %c0_40] : memref<8x4x128xf32, #tpu.memory_space<vmem>>, vector<1x4x128xf32>
    %78 = vector.shape_cast %77 : vector<1x4x128xf32> to vector<4x128xf32>
    %cst_41 = arith.constant dense<0.000000e+00> : vector<32x128xf32>
    %79 = tpu.matmul %0, %78, %cst_41 {dimension_numbers = #tpu.dot_dimension_numbers<[1], [0], [0], [1], [0, 0, 1, 1], [], []>} : vector<32x4xf32>, vector<4x128xf32>, vector<32x128xf32> -> vector<32x128xf32>
    %cst_42 = arith.constant dense<0.000000e+00> : vector<32x128xf32>
    %80 = tpu.matmul %1, %72, %cst_42 {dimension_numbers = #tpu.dot_dimension_numbers<[1], [0], [0], [1], [0, 0, 1, 1], [], []>} : vector<32x32xf32>, vector<32x128xf32>, vector<32x128xf32> -> vector<32x128xf32>
    %81 = arith.addf %79, %80 : vector<32x128xf32>
    %82 = vector.broadcast %2 : vector<32x1xf32> to vector<32x128xf32>
    %83 = arith.addf %81, %82 : vector<32x128xf32>
    %84 = math.tanh %83 : vector<32x128xf32>
    %85 = vector.broadcast %3 : vector<32x1xf32> to vector<32x128xf32>
    %86 = arith.mulf %84, %85 : vector<32x128xf32>
    %cst_43 = arith.constant dense<0.000000e+00> : vector<128xf32>
    %87 = vector.multi_reduction <add>, %86, %cst_43 [0] : vector<32x128xf32> to vector<128xf32>
    %88 = vector.shape_cast %87 : vector<128xf32> to vector<1x128xf32>
    %c7 = arith.constant 7 : index
    %c0_44 = arith.constant 0 : index
    %c0_45 = arith.constant 0 : index
    %89 = vector.load %arg1[%c7, %c0_44, %c0_45] : memref<8x4x128xf32, #tpu.memory_space<vmem>>, vector<1x4x128xf32>
    %90 = vector.shape_cast %89 : vector<1x4x128xf32> to vector<4x128xf32>
    %cst_46 = arith.constant dense<0.000000e+00> : vector<32x128xf32>
    %91 = tpu.matmul %0, %90, %cst_46 {dimension_numbers = #tpu.dot_dimension_numbers<[1], [0], [0], [1], [0, 0, 1, 1], [], []>} : vector<32x4xf32>, vector<4x128xf32>, vector<32x128xf32> -> vector<32x128xf32>
    %cst_47 = arith.constant dense<0.000000e+00> : vector<32x128xf32>
    %92 = tpu.matmul %1, %84, %cst_47 {dimension_numbers = #tpu.dot_dimension_numbers<[1], [0], [0], [1], [0, 0, 1, 1], [], []>} : vector<32x32xf32>, vector<32x128xf32>, vector<32x128xf32> -> vector<32x128xf32>
    %93 = arith.addf %91, %92 : vector<32x128xf32>
    %94 = vector.broadcast %2 : vector<32x1xf32> to vector<32x128xf32>
    %95 = arith.addf %93, %94 : vector<32x128xf32>
    %96 = math.tanh %95 : vector<32x128xf32>
    %97 = vector.broadcast %3 : vector<32x1xf32> to vector<32x128xf32>
    %98 = arith.mulf %96, %97 : vector<32x128xf32>
    %cst_48 = arith.constant dense<0.000000e+00> : vector<128xf32>
    %99 = vector.multi_reduction <add>, %98, %cst_48 [0] : vector<32x128xf32> to vector<128xf32>
    %100 = vector.shape_cast %99 : vector<128xf32> to vector<1x128xf32>
    %101 = tpu.concatenate %16, %28, %40, %52, %64, %76, %88, %100 in 0 : vector<1x128xf32>, vector<1x128xf32>, vector<1x128xf32>, vector<1x128xf32>, vector<1x128xf32>, vector<1x128xf32>, vector<1x128xf32>, vector<1x128xf32> -> vector<8x128xf32>
    %102 = arith.negf %101 : vector<8x128xf32>
    %103 = math.exp %102 : vector<8x128xf32>
    %cst_49 = arith.constant 1.000000e+00 : f32
    %104 = vector.broadcast %cst_49 : f32 to vector<8x128xf32>
    %105 = arith.addf %104, %103 : vector<8x128xf32>
    %106 = arith.divf %104, %105 : vector<8x128xf32>
    %c0_50 = arith.constant 0 : index
    %c0_51 = arith.constant 0 : index
    %107 = vector.load %arg7[%c0_50, %c0_51] : memref<8x128xf32, #tpu.memory_space<vmem>>, vector<8x128xf32>
    tpu.vector_store %arg7[%c0_50, %c0_51], %106 {strides = array<i32>} : memref<8x128xf32, #tpu.memory_space<vmem>>, vector<8x128xf32>,
    return
  }
  func.func @transform_0(%arg0: i32) -> (i32, i32, i32) {
    %c0_i32 = arith.constant 0 : i32
    %c0_i32_0 = arith.constant 0 : i32
    %c0_i32_1 = arith.constant 0 : i32
    return %c0_i32, %c0_i32_0, %arg0 : i32, i32, i32
  }
  func.func @transform_1(%arg0: i32) -> (i32, i32) {
    %c0_i32 = arith.constant 0 : i32
    %c0_i32_0 = arith.constant 0 : i32
    %c0_i32_1 = arith.constant 0 : i32
    return %c0_i32, %c0_i32_0 : i32, i32
  }
  func.func @transform_2(%arg0: i32) -> (i32, i32) {
    %c0_i32 = arith.constant 0 : i32
    %c0_i32_0 = arith.constant 0 : i32
    %c0_i32_1 = arith.constant 0 : i32
    return %c0_i32, %c0_i32_0 : i32, i32
  }
  func.func @transform_3(%arg0: i32) -> (i32, i32) {
    %c0_i32 = arith.constant 0 : i32
    %c0_i32_0 = arith.constant 0 : i32
    %c0_i32_1 = arith.constant 0 : i32
    return %c0_i32, %c0_i32_0 : i32, i32
  }
  func.func @transform_4(%arg0: i32) -> (i32, i32) {
    %c0_i32 = arith.constant 0 : i32
    %c0_i32_0 = arith.constant 0 : i32
    %c0_i32_1 = arith.constant 0 : i32
    return %c0_i32, %c0_i32_0 : i32, i32
  }
  func.func @transform_5(%arg0: i32) -> (i32, i32) {
    %c0_i32 = arith.constant 0 : i32
    %c0_i32_0 = arith.constant 0 : i32
    return %c0_i32, %arg0 : i32, i32
  }
  func.func @transform_6(%arg0: i32) -> (i32, i32) {
    %c0_i32 = arith.constant 0 : i32
    %c0_i32_0 = arith.constant 0 : i32
    return %c0_i32, %arg0 : i32, i32
  }
}

</mosaic_0001>

<llo_original>
// kernel: tpu_custom_call.1
$region0: #{tpu_custom_call.1}
  #allocation0 [shape = 'u32[]', space=smem, size = 0x4, offset = 0x4, fixed_abs, tag = 'smem constant byte address 0x4 - core index']
  #allocation1 [shape = 'u32[144,128]{1,0:T(1,128)}', space=vmem, size = 0x12000, scoped, tag = 'internal scratch']
  %s0 = inlined_call_operand.vmem [shape: f32[8,4,256], index: 0, kind: input, shape index: {}]
  %s1 = inlined_call_operand.vmem [shape: f32[32,4], index: 1, kind: input, shape index: {}]
  %s2 = inlined_call_operand.vmem [shape: f32[32,32], index: 2, kind: input, shape index: {}]
  %s3 = inlined_call_operand.vmem [shape: f32[32,1], index: 3, kind: input, shape index: {}]
  %s4 = inlined_call_operand.vmem [shape: f32[32,1], index: 4, kind: input, shape index: {}]
  %s5 = inlined_call_operand.hbm [shape: f32[32,256], index: 5, kind: input, shape index: {}]
  %s6 = inlined_call_operand.hbm [shape: f32[8,256], index: 6, kind: output, shape index: {}]
  %s7 = sld [smem:[#allocation0]]
  $region102: #{tpu_custom_call.1} parent=0
    _
  %s9 = ssub.s32 1, %s7
  %s10 = scalar_select 0, %s9, %s7
  $region1: #{tpu_custom_call.1} parent=0
    #allocation2 [shape = 'u8[32768]{0}', space=vmem, size = 0x8000, scoped, tag = 'input window, operand 0']
    #allocation3 [shape = 'u8[32768]{0}', space=vmem, size = 0x8000, scoped, tag = 'input window, operand 5']
    #allocation4 [shape = 's32[2]{0}', space=sflag, size = 0x8, scoped, tag = 'scoped memory for tpu_custom_call.1']
    #allocation5 [shape = 's32[2]{0}', space=sflag, size = 0x8, scoped, tag = 'scoped memory for tpu_custom_call.1']
    #allocation6 [shape = 'u8[8192]{0}', space=vmem, size = 0x2000, scoped, tag = 'output window, operand 0']
    %11 = vsyncpa [#allocation4], 0
    %s12 = scalar_lea.sflag [#allocation4], 1
    %13 = vsyncpa %s12, 0
    %14 = vsyncpa [#allocation5], 0
    %s15 = scalar_lea.sflag [#allocation5], 1
    %16 = vsyncpa %s15, 0
    loop: start=0, step=1, limit=4
    $region2: #{tpu_custom_call.1} parent=1 // loop_pre_header
      _
    $region3: #{tpu_custom_call.1} parent=1 // loop_header
      %s18 = sphi 0, %s22
      %p19 = scmp.ge.s32.totalorder %s18, 4
      %s28 = sphi 0, %s30
      %s31 = sphi 0, %s28
      %s32 = sphi 0, %s31
      %s48 = sphi 0, %s32
      %s52 = sphi 0, %s52
      %s54 = sphi 0, %s52
      %s55 = sphi 0, %s54
      %s69 = sphi 0, %s55
      %s73 = sphi 0, %s73
      %s75 = sphi 0, %s73
      %s76 = sphi 0, %s75
      %s90 = sphi 0, %s76
      %s94 = sphi 0, %s94
      %s96 = sphi 0, %s94
      %s97 = sphi 0, %s96
      %s111 = sphi 0, %s97
      %s115 = sphi 0, %s115
      %s117 = sphi 0, %s115
      %s118 = sphi 0, %s117
      %s132 = sphi 0, %s118
      %s138 = sphi 0, %s140
      %s141 = sphi 0, %s138
      %s142 = sphi 0, %s141
      %s158 = sphi 0, %s142
      %s164 = sphi 0, %s166
      %s167 = sphi 0, %s164
      %s168 = sphi 0, %s167
      %s184 = sphi 0, %s168
    $region4: #{tpu_custom_call.1} parent=1 // loop_header_branch
      %21 = sbr.rel (%p19) target = $region8
    $region5: #{tpu_custom_call.1} parent=1 // loop_body
      %s23 = ssub.s32 %s18, 1
      %s24 = ssub.s32 %s18, 2
      %s25 = sadd.s32 %s18, 1
      %s26 = ssub.s32 %s18, %s25
      %p27 = scmp.eq.s32.totalorder %s26, 0
      %s29 = sadd.s32 %s28, 1
      %s30 = scalar_select %p27, %s28, %s29
      %p33 = pneg %p27
      %p34 = scmp.eq.s32.totalorder %s18, 1
      %p35 = por %p33, %p34
      %p36 = scmp.ne.s32.totalorder %s28, %s31
      %p37 = scmp.eq.s32.totalorder %s18, 0
      %p38 = por %p36, %p37
      %p39 = scmp.ne.s32.totalorder %s28, %s31
      %p40 = scmp.eq.s32.totalorder %s23, 1
      %p41 = por %p39, %p40
      %p42 = scmp.ne.s32.totalorder %s31, %s32
      %p43 = scmp.eq.s32.totalorder %s23, 0
      %p44 = por %p42, %p43
      %p45 = scmp.ne.s32.totalorder %s31, %s32
      %p46 = scmp.eq.s32.totalorder %s24, 1
      %p47 = por %p45, %p46
      %p49 = scmp.ne.s32.totalorder %s32, %s48
      %p50 = scmp.eq.s32.totalorder %s24, 0
      %p51 = por %p49, %p50
      %s53 = sadd.s32 %s52, 1
      %p56 = scmp.eq.s32.totalorder %s18, 1
      %p57 = scmp.ne.s32.totalorder %s52, %s54
      %p58 = scmp.eq.s32.totalorder %s18, 0
      %p59 = por %p57, %p58
      %p60 = scmp.ne.s32.totalorder %s52, %s54
      %p61 = scmp.eq.s32.totalorder %s23, 1
      %p62 = por %p60, %p61
      %p63 = scmp.ne.s32.totalorder %s54, %s55
      %p64 = scmp.eq.s32.totalorder %s23, 0
      %p65 = por %p63, %p64
      %p66 = scmp.ne.s32.totalorder %s54, %s55
      %p67 = scmp.eq.s32.totalorder %s24, 1
      %p68 = por %p66, %p67
      %p70 = scmp.ne.s32.totalorder %s55, %s69
      %p71 = scmp.eq.s32.totalorder %s24, 0
      %p72 = por %p70, %p71
      %s74 = sadd.s32 %s73, 1
      %p77 = scmp.eq.s32.totalorder %s18, 1
      %p78 = scmp.ne.s32.totalorder %s73, %s75
      %p79 = scmp.eq.s32.totalorder %s18, 0
      %p80 = por %p78, %p79
      %p81 = scmp.ne.s32.totalorder %s73, %s75
      %p82 = scmp.eq.s32.totalorder %s23, 1
      %p83 = por %p81, %p82
      %p84 = scmp.ne.s32.totalorder %s75, %s76
      %p85 = scmp.eq.s32.totalorder %s23, 0
      %p86 = por %p84, %p85
      %p87 = scmp.ne.s32.totalorder %s75, %s76
      %p88 = scmp.eq.s32.totalorder %s24, 1
      %p89 = por %p87, %p88
      %p91 = scmp.ne.s32.totalorder %s76, %s90
      %p92 = scmp.eq.s32.totalorder %s24, 0
      %p93 = por %p91, %p92
      %s95 = sadd.s32 %s94, 1
      %p98 = scmp.eq.s32.totalorder %s18, 1
      %p99 = scmp.ne.s32.totalorder %s94, %s96
      %p100 = scmp.eq.s32.totalorder %s18, 0
      %p101 = por %p99, %p100
      %p102 = scmp.ne.s32.totalorder %s94, %s96
      %p103 = scmp.eq.s32.totalorder %s23, 1
      %p104 = por %p102, %p103
      %p105 = scmp.ne.s32.totalorder %s96, %s97
      %p106 = scmp.eq.s32.totalorder %s23, 0
      %p107 = por %p105, %p106
      %p108 = scmp.ne.s32.totalorder %s96, %s97
      %p109 = scmp.eq.s32.totalorder %s24, 1
      %p110 = por %p108, %p109
      %p112 = scmp.ne.s32.totalorder %s97, %s111
      %p113 = scmp.eq.s32.totalorder %s24, 0
      %p114 = por %p112, %p113
      %s116 = sadd.s32 %s115, 1
      %p119 = scmp.eq.s32.totalorder %s18, 1
      %p120 = scmp.ne.s32.totalorder %s115, %s117
      %p121 = scmp.eq.s32.totalorder %s18, 0
      %p122 = por %p120, %p121
      %p123 = scmp.ne.s32.totalorder %s115, %s117
      %p124 = scmp.eq.s32.totalorder %s23, 1
      %p125 = por %p123, %p124
      %p126 = scmp.ne.s32.totalorder %s117, %s118
      %p127 = scmp.eq.s32.totalorder %s23, 0
      %p128 = por %p126, %p127
      %p129 = scmp.ne.s32.totalorder %s117, %s118
      %p130 = scmp.eq.s32.totalorder %s24, 1
      %p131 = por %p129, %p130
      %p133 = scmp.ne.s32.totalorder %s118, %s132
      %p134 = scmp.eq.s32.totalorder %s24, 0
      %p135 = por %p133, %p134
      %s136 = ssub.s32 %s18, %s25
      %p137 = scmp.eq.s32.totalorder %s136, 0
      %s139 = sadd.s32 %s138, 1
      %s140 = scalar_select %p137, %s138, %s139
      %p143 = pneg %p137
      %p144 = scmp.eq.s32.totalorder %s18, 1
      %p145 = por %p143, %p144
      %p146 = scmp.ne.s32.totalorder %s138, %s141
      %p147 = scmp.eq.s32.totalorder %s18, 0
      %p148 = por %p146, %p147
      %p149 = scmp.ne.s32.totalorder %s138, %s141
      %p150 = scmp.eq.s32.totalorder %s23, 1
      %p151 = por %p149, %p150
      %p152 = scmp.ne.s32.totalorder %s141, %s142
      %p153 = scmp.eq.s32.totalorder %s23, 0
      %p154 = por %p152, %p153
      %p155 = scmp.ne.s32.totalorder %s141, %s142
      %p156 = scmp.eq.s32.totalorder %s24, 1
      %p157 = por %p155, %p156
      %p159 = scmp.ne.s32.totalorder %s142, %s158
      %p160 = scmp.eq.s32.totalorder %s24, 0
      %p161 = por %p159, %p160
      %s162 = ssub.s32 %s18, %s25
      %p163 = scmp.eq.s32.totalorder %s162, 0
      %s165 = sadd.s32 %s164, 1
      %s166 = scalar_select %p163, %s164, %s165
      %p169 = pneg %p163
      %p170 = scmp.eq.s32.totalorder %s18, 1
      %p171 = por %p169, %p170
      %p172 = scmp.ne.s32.totalorder %s164, %s167
      %p173 = scmp.eq.s32.totalorder %s18, 0
      %p174 = por %p172, %p173
      %p175 = scmp.ne.s32.totalorder %s164, %s167
      %p176 = scmp.eq.s32.totalorder %s23, 1
      %p177 = por %p175, %p176
      %p178 = scmp.ne.s32.totalorder %s167, %s168
      %p179 = scmp.eq.s32.totalorder %s23, 0
      %p180 = por %p178, %p179
      %p181 = scmp.ne.s32.totalorder %s167, %s168
      %p182 = scmp.eq.s32.totalorder %s24, 1
      %p183 = por %p181, %p182
      %p185 = scmp.ne.s32.totalorder %s168, %s184
      %p186 = scmp.eq.s32.totalorder %s24, 0
      %p187 = por %p185, %p186
      %p188 = scmp.le.s32.totalorder 1, %s18
      %p189 = scmp.lt.s32.totalorder %s18, 3
      %p190 = pnand %p188, %p189
      %p191 = pneg %p190
      // Predicated region
      $region9: #{tpu_custom_call.1} parent=5 // pred_check
        _
      $region10: #{tpu_custom_call.1} parent=5 // pred_check_branch
        %193 = sbr.rel (%p190) target = $region12
      $region11: #{tpu_custom_call.1} parent=5 // pred_region
        %s194 = ssub.s32 %s18, 1
        // Predicated region
        $region13: #{tpu_custom_call.1} parent=11 // pred_check
          %p195 = pneg %p65
        $region14: #{tpu_custom_call.1} parent=11 // pred_check_branch
          %197 = sbr.rel (%p195) target = $region16
        $region15: #{tpu_custom_call.1} parent=11 // pred_region
          _
        $region16: #{tpu_custom_call.1} parent=11 // pred_fallthru
          _
        // Predicated region
        $region17: #{tpu_custom_call.1} parent=11 // pred_check
          %p198 = pneg %p86
        $region18: #{tpu_custom_call.1} parent=11 // pred_check_branch
          %200 = sbr.rel (%p198) target = $region20
        $region19: #{tpu_custom_call.1} parent=11 // pred_region
          _
        $region20: #{tpu_custom_call.1} parent=11 // pred_fallthru
          _
        // Predicated region
        $region21: #{tpu_custom_call.1} parent=11 // pred_check
          %p201 = pneg %p107
        $region22: #{tpu_custom_call.1} parent=11 // pred_check_branch
          %203 = sbr.rel (%p201) target = $region24
        $region23: #{tpu_custom_call.1} parent=11 // pred_region
          _
        $region24: #{tpu_custom_call.1} parent=11 // pred_fallthru
          _
        // Predicated region
        $region25: #{tpu_custom_call.1} parent=11 // pred_check
          %p204 = pneg %p128
        $region26: #{tpu_custom_call.1} parent=11 // pred_check_branch
          %206 = sbr.rel (%p204) target = $region28
        $region27: #{tpu_custom_call.1} parent=11 // pred_region
          _
        $region28: #{tpu_custom_call.1} parent=11 // pred_fallthru
          _
      $region12: #{tpu_custom_call.1} parent=5 // pred_fallthru
        _
      %p207 = scmp.lt.s32.totalorder %s18, 2
      // Predicated region
      $region29: #{tpu_custom_call.1} parent=5 // pred_check
        %p208 = pneg %p207
      $region30: #{tpu_custom_call.1} parent=5 // pred_check_branch
        %210 = sbr.rel (%p208) target = $region32
      $region31: #{tpu_custom_call.1} parent=5 // pred_region
        // Predicated region
        $region33: #{tpu_custom_call.1} parent=31 // pred_check
          %p211 = pneg %p38
        $region34: #{tpu_custom_call.1} parent=31 // pred_check_branch
          %213 = sbr.rel (%p211) target = $region36
        $region35: #{tpu_custom_call.1} parent=31 // pred_region
          %s214 = sand.u32 %s28, 1
          %s215 = sand.u32 %s28, 1
          %s216 = smul.addr %s215, 32
          %s217 = scalar_lea.vmem [#allocation2], %s216
          %s218 = smul.addr %s18, 4
          %s219 = scalar_lea.vmem %s0, %s218
          // Predicated region
          $region37: #{tpu_custom_call.1} parent=35 // pred_check
            _
          $region38: #{tpu_custom_call.1} parent=35 // pred_check_branch
            %221 = sbr.rel (0) target = $region40
          $region39: #{tpu_custom_call.1} parent=35 // pred_region
            // Predicated region
            $region41: #{tpu_custom_call.1} parent=39 // pred_check
              _
            $region42: #{tpu_custom_call.1} parent=39 // pred_check_branch
              %223 = sbr.rel target = $region44
            $region43: #{tpu_custom_call.1} parent=39 // pred_region
              // Predicated region
              $region56: #{tpu_custom_call.1} parent=43 // pred_check
                _
              $region57: #{tpu_custom_call.1} parent=43 // pred_check_branch
                %252 = sbr.rel (0) target = $region59
              $region58: #{tpu_custom_call.1} parent=43 // pred_region
                loop: start=0, step=1, limit=1
                $region60: #{tpu_custom_call.1} parent=58 // loop_pre_header
                  _
                $region61: #{tpu_custom_call.1} parent=58 // loop_header
                  %s254 = sphi 0, %s258
                  %p255 = scmp.ge.s32.totalorder %s254, 1
                  %s259 = sphi %s219, %s219
                  %s260 = sphi %s217, %s217
                $region62: #{tpu_custom_call.1} parent=58 // loop_header_branch
                  %257 = sbr.rel (%p255) target = $region66
                $region63: #{tpu_custom_call.1} parent=58 // loop_body
                  _
                $region64: #{tpu_custom_call.1} parent=58 // loop_footer
                  %s258 = sadd.s32 1, %s254
                $region65: #{tpu_custom_call.1} parent=58 // loop_footer_branch
                  %253 = sbr.rel target = $region61
                $region66: #{tpu_custom_call.1} parent=58 // loop_exit
                  _
                loop: start=0, step=1, limit=1
                $region67: #{tpu_custom_call.1} parent=58 // loop_pre_header
                  _
                $region68: #{tpu_custom_call.1} parent=58 // loop_header
                  %s263 = sphi 0, %s267
                  %p264 = scmp.ge.s32.totalorder %s263, 1
                  %s268 = sphi %s219, %s219
                  %s269 = sphi %s217, %s217
                $region69: #{tpu_custom_call.1} parent=58 // loop_header_branch
                  %266 = sbr.rel (%p264) target = $region73
                $region70: #{tpu_custom_call.1} parent=58 // loop_body
                  %v270 = vld [vmem:[%s268] sm:$0xf]
                  %271 = vst [vmem:[%s269] sm:$0xf] %v270
                  %v272 = vld [vmem:[%s268 + $0x8] sm:$0xf]
                  %273 = vst [vmem:[%s269 + $0x4] sm:$0xf] %v272
                  %v274 = vld [vmem:[%s268 + $0x10] sm:$0xf]
                  %275 = vst [vmem:[%s269 + $0x8] sm:$0xf] %v274
                  %v276 = vld [vmem:[%s268 + $0x18] sm:$0xf]
                  %277 = vst [vmem:[%s269 + $0xc] sm:$0xf] %v276
                  %v278 = vld [vmem:[%s268 + $0x20] sm:$0xf]
                  %279 = vst [vmem:[%s269 + $0x10] sm:$0xf] %v278
                  %v280 = vld [vmem:[%s268 + $0x28] sm:$0xf]
                  %281 = vst [vmem:[%s269 + $0x14] sm:$0xf] %v280
                  %v282 = vld [vmem:[%s268 + $0x30] sm:$0xf]
                  %283 = vst [vmem:[%s269 + $0x18] sm:$0xf] %v282
                  %v284 = vld [vmem:[%s268 + $0x38] sm:$0xf]
                  %285 = vst [vmem:[%s269 + $0x1c] sm:$0xf] %v284
                $region71: #{tpu_custom_call.1} parent=58 // loop_footer
                  %s267 = sadd.s32 1, %s263
                $region72: #{tpu_custom_call.1} parent=58 // loop_footer_branch
                  %262 = sbr.rel target = $region68
                $region73: #{tpu_custom_call.1} parent=58 // loop_exit
                  _
              $region59: #{tpu_custom_call.1} parent=43 // pred_fallthru
                _
            $region44: #{tpu_custom_call.1} parent=39 // pred_fallthru
              _
            // Predicated region
            $region45: #{tpu_custom_call.1} parent=39 // pred_check
              _
            $region46: #{tpu_custom_call.1} parent=39 // pred_check_branch
              %225 = sbr.rel (0) target = $region48
            $region47: #{tpu_custom_call.1} parent=39 // pred_region
              loop: start=0, step=1, limit=1
              $region49: #{tpu_custom_call.1} parent=47 // loop_pre_header
                _
              $region50: #{tpu_custom_call.1} parent=47 // loop_header
                %s228 = sphi 0, %s232
                %p229 = scmp.ge.s32.totalorder %s228, 1
                %s233 = sphi %s219, %s219
                %s234 = sphi %s217, %s217
              $region51: #{tpu_custom_call.1} parent=47 // loop_header_branch
                %231 = sbr.rel (%p229) target = $region55
              $region52: #{tpu_custom_call.1} parent=47 // loop_body
                %v235 = vld [vmem:[%s233] sm:$0xf]
                %236 = vst [vmem:[%s234] sm:$0xf] %v235
                %v237 = vld [vmem:[%s233 + $0x8] sm:$0xf]
                %238 = vst [vmem:[%s234 + $0x4] sm:$0xf] %v237
                %v239 = vld [vmem:[%s233 + $0x10] sm:$0xf]
                %240 = vst [vmem:[%s234 + $0x8] sm:$0xf] %v239
                %v241 = vld [vmem:[%s233 + $0x18] sm:$0xf]
                %242 = vst [vmem:[%s234 + $0xc] sm:$0xf] %v241
                %v243 = vld [vmem:[%s233 + $0x20] sm:$0xf]
                %244 = vst [vmem:[%s234 + $0x10] sm:$0xf] %v243
                %v245 = vld [vmem:[%s233 + $0x28] sm:$0xf]
                %246 = vst [vmem:[%s234 + $0x14] sm:$0xf] %v245
                %v247 = vld [vmem:[%s233 + $0x30] sm:$0xf]
                %248 = vst [vmem:[%s234 + $0x18] sm:$0xf] %v247
                %v249 = vld [vmem:[%s233 + $0x38] sm:$0xf]
                %250 = vst [vmem:[%s234 + $0x1c] sm:$0xf] %v249
              $region53: #{tpu_custom_call.1} parent=47 // loop_footer
                %s232 = sadd.s32 1, %s228
              $region54: #{tpu_custom_call.1} parent=47 // loop_footer_branch
                %227 = sbr.rel target = $region50
              $region55: #{tpu_custom_call.1} parent=47 // loop_exit
                _
            $region48: #{tpu_custom_call.1} parent=39 // pred_fallthru
              _
          $region40: #{tpu_custom_call.1} parent=35 // pred_fallthru
            _
          %286 = vnop
        $region36: #{tpu_custom_call.1} parent=31 // pred_fallthru
          _
        // Predicated region
        $region74: #{tpu_custom_call.1} parent=31 // pred_check
          %p287 = pneg %p148
        $region75: #{tpu_custom_call.1} parent=31 // pred_check_branch
          %289 = sbr.rel (%p287) target = $region77
        $region76: #{tpu_custom_call.1} parent=31 // pred_region
          %s290 = sand.u32 %s138, 1
          %s291 = scalar_lea.sflag [#allocation4], %s290
          %s292 = sand.u32 %s138, 1
          %s293 = smul.addr %s292, 32
          %s294 = scalar_lea.vmem [#allocation3], %s293
          %s296 = ssub.s32 512, 512
          %297 = vsyncadd %s291, %s296
          %s298 = smul.addr %s18, 128
          %s299 = scalar_lea.hbm %s5, %s298
          %s300 = sshll.u32 %s294, 4
          %s301 = int_to_ptr.vmem [resolvable:$true] %s300
          %306 = dma.hbm_to_vmem [thread:$0]  %s299, 512, %s301, %s291, 256, 128, 8
        $region77: #{tpu_custom_call.1} parent=31 // pred_fallthru
          _
      $region32: #{tpu_custom_call.1} parent=5 // pred_fallthru
        _
      %p307 = scmp.le.s32.totalorder 1, %s18
      %p308 = scmp.lt.s32.totalorder %s18, 3
      %p309 = pnand %p307, %p308
      %p310 = pneg %p309
      // Predicated region
      $region78: #{tpu_custom_call.1} parent=5 // pred_check
        _
      $region79: #{tpu_custom_call.1} parent=5 // pred_check_branch
        %312 = sbr.rel (%p309) target = $region81
      $region80: #{tpu_custom_call.1} parent=5 // pred_region
        %s313 = ssub.s32 %s18, 1
        %s314 = sand.u32 %s31, 1
        %s315 = sand.u32 %s31, 1
        %s316 = smul.addr %s315, 32
        %s317 = scalar_lea.vmem [#allocation2], %s316
        // Predicated region
        $region82: #{tpu_custom_call.1} parent=80 // pred_check
          %p318 = pneg %p44
        $region83: #{tpu_custom_call.1} parent=80 // pred_check_branch
          %320 = sbr.rel (%p318) target = $region85
        $region84: #{tpu_custom_call.1} parent=80 // pred_region
          _
        $region85: #{tpu_custom_call.1} parent=80 // pred_fallthru
          _
        %s321 = sand.u32 %s141, 1
        %s322 = scalar_lea.sflag [#allocation4], %s321
        %s323 = sand.u32 %s141, 1
        %s324 = smul.addr %s323, 32
        %s325 = scalar_lea.vmem [#allocation3], %s324
        // Predicated region
        $region86: #{tpu_custom_call.1} parent=80 // pred_check
          %p326 = pneg %p154
        $region87: #{tpu_custom_call.1} parent=80 // pred_check_branch
          %328 = sbr.rel (%p326) target = $region89
        $region88: #{tpu_custom_call.1} parent=80 // pred_region
          %329 = dma.done %s322, 512
        $region89: #{tpu_custom_call.1} parent=80 // pred_fallthru
          _
        %s330 = sand.u32 %s31, 1
        %s331 = sand.u32 %s31, 1
        %s332 = smul.addr %s331, 32
        %s333 = scalar_lea.vmem [#allocation2], %s332
        %p334 = pneg %p44
        %p335 = pneg %p41
        %p336 = pneg %p65
        %p337 = pneg %p62
        %p338 = pneg %p86
        %p339 = pneg %p83
        %p340 = pneg %p107
        %p341 = pneg %p104
        %p342 = pneg %p128
        %p343 = pneg %p125
        %s344 = sand.u32 %s141, 1
        %s345 = scalar_lea.sflag [#allocation4], %s344
        %s346 = sand.u32 %s141, 1
        %s347 = smul.addr %s346, 32
        %s348 = scalar_lea.vmem [#allocation3], %s347
        %p349 = pneg %p154
        %p350 = pneg %p151
        %p351 = pneg %p180
        %p352 = pneg %p177
        %s353 = sand.u32 %s167, 1
        %s354 = scalar_lea.sflag [#allocation5], %s353
        %s355 = sand.u32 %s167, 1
        %s356 = smul.addr %s355, 8
        %s357 = scalar_lea.vmem [#allocation6], %s356
        %v358 = vld [vmem:[%s1] sm:$0xff]
        %v359 = vld [vmem:[%s1 + $0x8] sm:$0xff]
        %v360 = vld [vmem:[%s1 + $0x10] sm:$0xff]
        %v361 = vld [vmem:[%s1 + $0x18] sm:$0xff]
        %v362 = vld [vmem:[%s2] sm:$0xff]
        %v363 = vld [vmem:[%s2 + $0x8] sm:$0xff]
        %v364 = vld [vmem:[%s2 + $0x10] sm:$0xff]
        %v365 = vld [vmem:[%s2 + $0x18] sm:$0xff]
        %v366 = vld [vmem:[%s3] sm:$0xff]
        %v367 = vld [vmem:[%s3 + $0x8] sm:$0xff]
        %v368 = vld [vmem:[%s3 + $0x10] sm:$0xff]
        %v369 = vld [vmem:[%s3 + $0x18] sm:$0xff]
        %v370 = vld [vmem:[%s4] sm:$0xff]
        %v371 = vld [vmem:[%s4 + $0x8] sm:$0xff]
        %v372 = vld [vmem:[%s4 + $0x10] sm:$0xff]
        %v373 = vld [vmem:[%s4 + $0x18] sm:$0xff]
        %v374 = vld [vmem:[%s325] sm:$0xff]
        %v375 = vld [vmem:[%s325 + $0x8] sm:$0xff]
        %v376 = vld [vmem:[%s325 + $0x10] sm:$0xff]
        %v377 = vld [vmem:[%s325 + $0x18] sm:$0xff]
        %v378 = vld [vmem:[%s317] sm:$0xf]
        %vm379 = vcmask 261120
        %v381 = vsel %vm379, %v362, 0
        %v384 = vsel %vm379, %v363, 0
        %v387 = vsel %vm379, %v364, 0
        %v390 = vsel %vm379, %v365, 0
        %392 = vmatprep.subr.mxu0 0.0
        %393 = vmatpush1.msra.mxu0 %v374
        %394 = vmatprep.subr.mxu0 0.0
        %395 = vmatpush1.msra.mxu0 %v375
        %396 = vmatprep.subr.mxu0 0.0
        %397 = vmatpush1.msra.mxu0 %v376
        %398 = vmatprep.subr.mxu0 0.0
        %399 = vmatpush1.msra.mxu0 %v377
        %400 = vmatprep.subr.mxu0 0.0
        %401 = vmatpush1.msra.mxu0 0.0
        %402 = vmatprep.subr.mxu0 0.0
        %403 = vmatpush1.msra.mxu0 0.0
        %404 = vmatprep.subr.mxu0 0.0
        %405 = vmatpush1.msra.mxu0 0.0
        %406 = vmatprep.subr.mxu0 0.0
        %407 = vmatpush1.msra.mxu0 0.0
        %408 = vmatprep.subr.mxu0 0.0
        %409 = vmatpush1.msra.mxu0 0.0
        %410 = vmatprep.subr.mxu0 0.0
        %411 = vmatpush1.msra.mxu0 0.0
        %412 = vmatprep.subr.mxu0 0.0
        %413 = vmatpush1.msra.mxu0 0.0
        %414 = vmatprep.subr.mxu0 0.0
        %415 = vmatpush1.msra.mxu0 0.0
        %416 = vmatprep.subr.mxu0 0.0
        %417 = vmatpush1.msra.mxu0 0.0
        %418 = vmatprep.subr.mxu0 0.0
        %419 = vmatpush1.msra.mxu0 0.0
        %420 = vmatprep.subr.mxu0 0.0
        %421 = vmatpush1.msra.mxu0 0.0
        %422 = vmatprep.subr.mxu0 0.0
        %423 = vmatpush1.msra.mxu0 0.0
        %424 = vmatprep.subr.mxu0 0.0
        %425 = vmatpush1.msra.mxu0 0.0
        %426 = vmatprep.subr.mxu0 0.0
        %427 = vmatpush1.msra.mxu0 0.0
        %428 = vmatprep.subr.mxu0 0.0
        %429 = vmatpush1.msra.mxu0 0.0
        %430 = vmatprep.subr.mxu0 0.0
        %431 = vmatpush1.msra.mxu0 0.0
        %432 = vmatprep.subr.mxu0 0.0
        %433 = vmatpush1.msra.mxu0 0.0
        %434 = vmatprep.subr.mxu0 0.0
        %435 = vmatpush1.msra.mxu0 0.0
        %436 = vmatprep.subr.mxu0 0.0
        %437 = vmatpush1.msra.mxu0 0.0
        %438 = vmatprep.subr.mxu0 0.0
        %439 = vmatpush1.msra.mxu0 0.0
        %440 = vmatprep.subr.mxu0 0.0
        %441 = vmatpush1.msra.mxu0 0.0
        %442 = vmatprep.subr.mxu0 0.0
        %443 = vmatpush1.msra.mxu0 0.0
        %444 = vmatprep.subr.mxu0 0.0
        %445 = vmatpush1.msra.mxu0 0.0
        %446 = vmatprep.subr.mxu0 0.0
        %447 = vmatpush1.msra.mxu0 0.0
        %448 = vmatprep.subr.mxu0 0.0
        %449 = vmatpush1.msra.mxu0 0.0
        %450 = vmatprep.subr.mxu0 0.0
        %451 = vmatpush1.msra.mxu0 0.0
        %452 = vmatprep.subr.mxu0 0.0
        %453 = vmatpush1.msra.mxu0 0.0
        %454 = vmatprep.subr.mxu0 0.0
        %455 = vmatpush1.msra.mxu0 0.0
        %456 = vmatprep.mubr.f32.mxu0 0.0
        %457 = vmatmul.mubr.f32.gmra.mrb[0].mxu0 %v381
        %v458 = vpop.f32.mrb[0].mxu0
        %v459 = vadd.f32 0.0, %v458
        %v460 = vpop.f32.mrb[0].mxu0
        %461 = vmatprep.mubr.f32.mxu0 0.0
        %462 = vmatmul.mubr.f32.gmra.mrb[0].mxu0 %v384
        %v463 = vpop.f32.mrb[0].mxu0
        %v464 = vadd.f32 0.0, %v463
        %v465 = vpop.f32.mrb[0].mxu0
        %466 = vmatprep.mubr.f32.mxu0 0.0
        %467 = vmatmul.mubr.f32.gmra.mrb[0].mxu0 %v387
        %v468 = vpop.f32.mrb[0].mxu0
        %v469 = vadd.f32 0.0, %v468
        %v470 = vpop.f32.mrb[0].mxu0
        %471 = vmatprep.mubr.f32.mxu0 0.0
        %472 = vmatmul.mubr.f32.gmra.mrb[0].mxu0 %v390
        %v473 = vpop.f32.mrb[0].mxu0
        %v474 = vadd.f32 0.0, %v473
        %v475 = vpop.f32.mrb[0].mxu0
        %476 = vdwg.mxu0
        %vm477 = vcmask 31744
        %v479 = vsel %vm477, %v358, 0
        %v482 = vsel %vm477, %v359, 0
        %v485 = vsel %vm477, %v360, 0
        %v488 = vsel %vm477, %v361, 0
        %vm490 = vcmask 1043456
        %v492 = vsel %vm490, %v378, 0
        %494 = vmatprep.subr.mxu0 0.0
        %495 = vmatpush1.msra.mxu0 %v492
        %496 = vmatprep.subr.mxu0 0.0
        %497 = vmatpush1.msra.mxu0 0.0
        %498 = vmatprep.subr.mxu0 0.0
        %499 = vmatpush1.msra.mxu0 0.0
        %500 = vmatprep.subr.mxu0 0.0
        %501 = vmatpush1.msra.mxu0 0.0
        %502 = vmatprep.subr.mxu0 0.0
        %503 = vmatpush1.msra.mxu0 0.0
        %504 = vmatprep.subr.mxu0 0.0
        %505 = vmatpush1.msra.mxu0 0.0
        %506 = vmatprep.subr.mxu0 0.0
        %507 = vmatpush1.msra.mxu0 0.0
        %508 = vmatprep.subr.mxu0 0.0
        %509 = vmatpush1.msra.mxu0 0.0
        %510 = vmatprep.subr.mxu0 0.0
        %511 = vmatpush1.msra.mxu0 0.0
        %512 = vmatprep.subr.mxu0 0.0
        %513 = vmatpush1.msra.mxu0 0.0
        %514 = vmatprep.subr.mxu0 0.0
        %515 = vmatpush1.msra.mxu0 0.0
        %516 = vmatprep.subr.mxu0 0.0
        %517 = vmatpush1.msra.mxu0 0.0
        %518 = vmatprep.subr.mxu0 0.0
        %519 = vmatpush1.msra.mxu0 0.0
        %520 = vmatprep.subr.mxu0 0.0
        %521 = vmatpush1.msra.mxu0 0.0
        %522 = vmatprep.subr.mxu0 0.0
        %523 = vmatpush1.msra.mxu0 0.0
        %524 = vmatprep.subr.mxu0 0.0
        %525 = vmatpush1.msra.mxu0 0.0
        %526 = vmatprep.subr.mxu0 0.0
        %527 = vmatpush1.msra.mxu0 0.0
        %528 = vmatprep.subr.mxu0 0.0
        %529 = vmatpush1.msra.mxu0 0.0
        %530 = vmatprep.subr.mxu0 0.0
        %531 = vmatpush1.msra.mxu0 0.0
        %532 = vmatprep.subr.mxu0 0.0
        %533 = vmatpush1.msra.mxu0 0.0
        %534 = vmatprep.subr.mxu0 0.0
        %535 = vmatpush1.msra.mxu0 0.0
        %536 = vmatprep.subr.mxu0 0.0
        %537 = vmatpush1.msra.mxu0 0.0
        %538 = vmatprep.subr.mxu0 0.0
        %539 = vmatpush1.msra.mxu0 0.0
        %540 = vmatprep.subr.mxu0 0.0
        %541 = vmatpush1.msra.mxu0 0.0
        %542 = vmatprep.subr.mxu0 0.0
        %543 = vmatpush1.msra.mxu0 0.0
        %544 = vmatprep.subr.mxu0 0.0
        %545 = vmatpush1.msra.mxu0 0.0
        %546 = vmatprep.subr.mxu0 0.0
        %547 = vmatpush1.msra.mxu0 0.0
        %548 = vmatprep.subr.mxu0 0.0
        %549 = vmatpush1.msra.mxu0 0.0
        %550 = vmatprep.subr.mxu0 0.0
        %551 = vmatpush1.msra.mxu0 0.0
        %552 = vmatprep.subr.mxu0 0.0
        %553 = vmatpush1.msra.mxu0 0.0
        %554 = vmatprep.subr.mxu0 0.0
        %555 = vmatpush1.msra.mxu0 0.0
        %556 = vmatprep.subr.mxu0 0.0
        %557 = vmatpush1.msra.mxu0 0.0
        %558 = vmatprep.mubr.f32.mxu0 0.0
        %559 = vmatmul.mubr.f32.gmra.mrb[0].mxu0 %v479
        %v560 = vpop.f32.mrb[0].mxu0
        %v561 = vadd.f32 %v459, %v560
        %v562 = vpop.f32.mrb[0].mxu0
        %563 = vmatprep.mubr.f32.mxu0 0.0
        %564 = vmatmul.mubr.f32.gmra.mrb[0].mxu0 %v482
        %v565 = vpop.f32.mrb[0].mxu0
        %v566 = vadd.f32 %v464, %v565
        %v567 = vpop.f32.mrb[0].mxu0
        %568 = vmatprep.mubr.f32.mxu0 0.0
        %569 = vmatmul.mubr.f32.gmra.mrb[0].mxu0 %v485
        %v570 = vpop.f32.mrb[0].mxu0
        %v571 = vadd.f32 %v469, %v570
        %v572 = vpop.f32.mrb[0].mxu0
        %573 = vmatprep.mubr.f32.mxu0 0.0
        %574 = vmatmul.mubr.f32.gmra.mrb[0].mxu0 %v488
        %v575 = vpop.f32.mrb[0].mxu0
        %v576 = vadd.f32 %v474, %v575
        %v577 = vpop.f32.mrb[0].mxu0
        %578 = vdwg.mxu0
        %580 = vset.pattern.permute.xlu0 0
        %581 = vperm.xlu0 %580, %v366
        %v582 = vpop.permute.xlu0 %581
        %585 = vset.pattern.permute.xlu0 0
        %586 = vperm.xlu0 %585, %v367
        %v587 = vpop.permute.xlu0 %586
        %590 = vset.pattern.permute.xlu0 0
        %591 = vperm.xlu0 %590, %v368
        %v592 = vpop.permute.xlu0 %591
        %595 = vset.pattern.permute.xlu0 0
        %596 = vperm.xlu0 %595, %v369
        %v597 = vpop.permute.xlu0 %596
        %v599 = vadd.f32 %v561, %v582
        %v600 = vadd.f32 %v566, %v587
        %v601 = vadd.f32 %v571, %v592
        %v602 = vadd.f32 %v576, %v597
        %v603 = vtanh.pop %v599
        %v604 = vtanh.pop %v600
        %v605 = vtanh.pop %v601
        %v606 = vtanh.pop %v602
        %608 = vset.pattern.permute.xlu0 0
        %609 = vperm.xlu0 %608, %v370
        %v610 = vpop.permute.xlu0 %609
        %613 = vset.pattern.permute.xlu0 0
        %614 = vperm.xlu0 %613, %v371
        %v615 = vpop.permute.xlu0 %614
        %618 = vset.pattern.permute.xlu0 0
        %619 = vperm.xlu0 %618, %v372
        %v620 = vpop.permute.xlu0 %619
        %623 = vset.pattern.permute.xlu0 0
        %624 = vperm.xlu0 %623, %v373
        %v625 = vpop.permute.xlu0 %624
        %v627 = vmul.f32 %v603, %v610
        %v628 = vmul.f32 %v604, %v615
        %v629 = vmul.f32 %v605, %v620
        %v630 = vmul.f32 %v606, %v625
        %v631 = vadd.f32 %v627, %v628
        %v632 = vadd.f32 %v631, %v629
        %v633 = vadd.f32 %v632, %v630
        %v634 = vrot.slane %v633, 4
        %v635 = vadd.f32 %v633, %v634
        %v636 = vrot.slane %v635, 2
        %v637 = vadd.f32 %v635, %v636
        %v638 = vrot.slane %v637, 1
        %v639 = vadd.f32 %v637, %v638
        %s640 = scalar_lea.vmem %s317, 4 [#allocation2]
        %v641 = vld [vmem:[%s640] sm:$0xf]
        %642 = vmatprep.subr.mxu0 0.0
        %643 = vmatpush1.msra.mxu0 %v603
        %644 = vmatprep.subr.mxu0 0.0
        %645 = vmatpush1.msra.mxu0 %v604
        %646 = vmatprep.subr.mxu0 0.0
        %647 = vmatpush1.msra.mxu0 %v605
        %648 = vmatprep.subr.mxu0 0.0
        %649 = vmatpush1.msra.mxu0 %v606
        %650 = vmatprep.subr.mxu0 0.0
        %651 = vmatpush1.msra.mxu0 0.0
        %652 = vmatprep.subr.mxu0 0.0
        %653 = vmatpush1.msra.mxu0 0.0
        %654 = vmatprep.subr.mxu0 0.0
        %655 = vmatpush1.msra.mxu0 0.0
        %656 = vmatprep.subr.mxu0 0.0
        %657 = vmatpush1.msra.mxu0 0.0
        %658 = vmatprep.subr.mxu0 0.0
        %659 = vmatpush1.msra.mxu0 0.0
        %660 = vmatprep.subr.mxu0 0.0
        %661 = vmatpush1.msra.mxu0 0.0
        %662 = vmatprep.subr.mxu0 0.0
        %663 = vmatpush1.msra.mxu0 0.0
        %664 = vmatprep.subr.mxu0 0.0
        %665 = vmatpush1.msra.mxu0 0.0
        %666 = vmatprep.subr.mxu0 0.0
        %667 = vmatpush1.msra.mxu0 0.0
        %668 = vmatprep.subr.mxu0 0.0
        %669 = vmatpush1.msra.mxu0 0.0
        %670 = vmatprep.subr.mxu0 0.0
        %671 = vmatpush1.msra.mxu0 0.0
        %672 = vmatprep.subr.mxu0 0.0
        %673 = vmatpush1.msra.mxu0 0.0
        %674 = vmatprep.subr.mxu0 0.0
        %675 = vmatpush1.msra.mxu0 0.0
        %676 = vmatprep.subr.mxu0 0.0
        %677 = vmatpush1.msra.mxu0 0.0
        %678 = vmatprep.subr.mxu0 0.0
        %679 = vmatpush1.msra.mxu0 0.0
        %680 = vmatprep.subr.mxu0 0.0
        %681 = vmatpush1.msra.mxu0 0.0
        %682 = vmatprep.subr.mxu0 0.0
        %683 = vmatpush1.msra.mxu0 0.0
        %684 = vmatprep.subr.mxu0 0.0
        %685 = vmatpush1.msra.mxu0 0.0
        %686 = vmatprep.subr.mxu0 0.0
        %687 = vmatpush1.msra.mxu0 0.0
        %688 = vmatprep.subr.mxu0 0.0
        %689 = vmatpush1.msra.mxu0 0.0
        %690 = vmatprep.subr.mxu0 0.0
        %691 = vmatpush1.msra.mxu0 0.0
        %692 = vmatprep.subr.mxu0 0.0
        %693 = vmatpush1.msra.mxu0 0.0
        %694 = vmatprep.subr.mxu0 0.0
        %695 = vmatpush1.msra.mxu0 0.0
        %696 = vmatprep.subr.mxu0 0.0
        %697 = vmatpush1.msra.mxu0 0.0
        %698 = vmatprep.subr.mxu0 0.0
        %699 = vmatpush1.msra.mxu0 0.0
        %700 = vmatprep.subr.mxu0 0.0
        %701 = vmatpush1.msra.mxu0 0.0
        %702 = vmatprep.subr.mxu0 0.0
        %703 = vmatpush1.msra.mxu0 0.0
        %704 = vmatprep.subr.mxu0 0.0
        %705 = vmatpush1.msra.mxu0 0.0
        %706 = vmatprep.mubr.f32.mxu0 0.0
        %707 = vmatmul.mubr.f32.gmra.mrb[0].mxu0 %v381
        %v708 = vpop.f32.mrb[0].mxu0
        %v709 = vadd.f32 0.0, %v708
        %v710 = vpop.f32.mrb[0].mxu0
        %711 = vmatprep.mubr.f32.mxu0 0.0
        %712 = vmatmul.mubr.f32.gmra.mrb[0].mxu0 %v384
        %v713 = vpop.f32.mrb[0].mxu0
        %v714 = vadd.f32 0.0, %v713
        %v715 = vpop.f32.mrb[0].mxu0
        %716 = vmatprep.mubr.f32.mxu0 0.0
        %717 = vmatmul.mubr.f32.gmra.mrb[0].mxu0 %v387
        %v718 = vpop.f32.mrb[0].mxu0
        %v719 = vadd.f32 0.0, %v718
        %v720 = vpop.f32.mrb[0].mxu0
        %721 = vmatprep.mubr.f32.mxu0 0.0
        %722 = vmatmul.mubr.f32.gmra.mrb[0].mxu0 %v390
        %v723 = vpop.f32.mrb[0].mxu0
        %v724 = vadd.f32 0.0, %v723
        %v725 = vpop.f32.mrb[0].mxu0
        %726 = vdwg.mxu0
        %v728 = vsel %vm490, %v641, 0
        %730 = vmatprep.subr.mxu0 0.0
        %731 = vmatpush1.msra.mxu0 %v728
        %732 = vmatprep.subr.mxu0 0.0
        %733 = vmatpush1.msra.mxu0 0.0
        %734 = vmatprep.subr.mxu0 0.0
        %735 = vmatpush1.msra.mxu0 0.0
        %736 = vmatprep.subr.mxu0 0.0
        %737 = vmatpush1.msra.mxu0 0.0
        %738 = vmatprep.subr.mxu0 0.0
        %739 = vmatpush1.msra.mxu0 0.0
        %740 = vmatprep.subr.mxu0 0.0
        %741 = vmatpush1.msra.mxu0 0.0
        %742 = vmatprep.subr.mxu0 0.0
        %743 = vmatpush1.msra.mxu0 0.0
        %744 = vmatprep.subr.mxu0 0.0
        %745 = vmatpush1.msra.mxu0 0.0
        %746 = vmatprep.subr.mxu0 0.0
        %747 = vmatpush1.msra.mxu0 0.0
        %748 = vmatprep.subr.mxu0 0.0
        %749 = vmatpush1.msra.mxu0 0.0
        %750 = vmatprep.subr.mxu0 0.0
        %751 = vmatpush1.msra.mxu0 0.0
        %752 = vmatprep.subr.mxu0 0.0
        %753 = vmatpush1.msra.mxu0 0.0
        %754 = vmatprep.subr.mxu0 0.0
        %755 = vmatpush1.msra.mxu0 0.0
        %756 = vmatprep.subr.mxu0 0.0
        %757 = vmatpush1.msra.mxu0 0.0
        %758 = vmatprep.subr.mxu0 0.0
        %759 = vmatpush1.msra.mxu0 0.0
        %760 = vmatprep.subr.mxu0 0.0
        %761 = vmatpush1.msra.mxu0 0.0
        %762 = vmatprep.subr.mxu0 0.0
        %763 = vmatpush1.msra.mxu0 0.0
        %764 = vmatprep.subr.mxu0 0.0
        %765 = vmatpush1.msra.mxu0 0.0
        %766 = vmatprep.subr.mxu0 0.0
        %767 = vmatpush1.msra.mxu0 0.0
        %768 = vmatprep.subr.mxu0 0.0
        %769 = vmatpush1.msra.mxu0 0.0
        %770 = vmatprep.subr.mxu0 0.0
        %771 = vmatpush1.msra.mxu0 0.0
        %772 = vmatprep.subr.mxu0 0.0
        %773 = vmatpush1.msra.mxu0 0.0
        %774 = vmatprep.subr.mxu0 0.0
        %775 = vmatpush1.msra.mxu0 0.0
        %776 = vmatprep.subr.mxu0 0.0
        %777 = vmatpush1.msra.mxu0 0.0
        %778 = vmatprep.subr.mxu0 0.0
        %779 = vmatpush1.msra.mxu0 0.0
        %780 = vmatprep.subr.mxu0 0.0
        %781 = vmatpush1.msra.mxu0 0.0
        %782 = vmatprep.subr.mxu0 0.0
        %783 = vmatpush1.msra.mxu0 0.0
        %784 = vmatprep.subr.mxu0 0.0
        %785 = vmatpush1.msra.mxu0 0.0
        %786 = vmatprep.subr.mxu0 0.0
        %787 = vmatpush1.msra.mxu0 0.0
        %788 = vmatprep.subr.mxu0 0.0
        %789 = vmatpush1.msra.mxu0 0.0
        %790 = vmatprep.subr.mxu0 0.0
        %791 = vmatpush1.msra.mxu0 0.0
        %792 = vmatprep.subr.mxu0 0.0
        %793 = vmatpush1.msra.mxu0 0.0
        %794 = vmatprep.mubr.f32.mxu0 0.0
        %795 = vmatmul.mubr.f32.gmra.mrb[0].mxu0 %v479
        %v796 = vpop.f32.mrb[0].mxu0
        %v797 = vadd.f32 %v709, %v796
        %v798 = vpop.f32.mrb[0].mxu0
        %799 = vmatprep.mubr.f32.mxu0 0.0
        %800 = vmatmul.mubr.f32.gmra.mrb[0].mxu0 %v482
        %v801 = vpop.f32.mrb[0].mxu0
        %v802 = vadd.f32 %v714, %v801
        %v803 = vpop.f32.mrb[0].mxu0
        %804 = vmatprep.mubr.f32.mxu0 0.0
        %805 = vmatmul.mubr.f32.gmra.mrb[0].mxu0 %v485
        %v806 = vpop.f32.mrb[0].mxu0
        %v807 = vadd.f32 %v719, %v806
        %v808 = vpop.f32.mrb[0].mxu0
        %809 = vmatprep.mubr.f32.mxu0 0.0
        %810 = vmatmul.mubr.f32.gmra.mrb[0].mxu0 %v488
        %v811 = vpop.f32.mrb[0].mxu0
        %v812 = vadd.f32 %v724, %v811
        %v813 = vpop.f32.mrb[0].mxu0
        %814 = vdwg.mxu0
        %v815 = vadd.f32 %v797, %v582
        %v816 = vadd.f32 %v802, %v587
        %v817 = vadd.f32 %v807, %v592
        %v818 = vadd.f32 %v812, %v597
        %v819 = vtanh.pop %v815
        %v820 = vtanh.pop %v816
        %v821 = vtanh.pop %v817
        %v822 = vtanh.pop %v818
        %v823 = vmul.f32 %v819, %v610
        %v824 = vmul.f32 %v820, %v615
        %v825 = vmul.f32 %v821, %v620
        %v826 = vmul.f32 %v822, %v625
        %v827 = vadd.f32 %v823, %v824
        %v828 = vadd.f32 %v827, %v825
        %v829 = vadd.f32 %v828, %v826
        %v830 = vrot.slane %v829, 4
        %v831 = vadd.f32 %v829, %v830
        %v832 = vrot.slane %v831, 2
        %v833 = vadd.f32 %v831, %v832
        %v834 = vrot.slane %v833, 1
        %v835 = vadd.f32 %v833, %v834
        %s836 = scalar_lea.vmem %s317, 8 [#allocation2]
        %v837 = vld [vmem:[%s836] sm:$0xf]
        %838 = vmatprep.subr.mxu0 0.0
        %839 = vmatpush1.msra.mxu0 %v819
        %840 = vmatprep.subr.mxu0 0.0
        %841 = vmatpush1.msra.mxu0 %v820
        %842 = vmatprep.subr.mxu0 0.0
        %843 = vmatpush1.msra.mxu0 %v821
        %844 = vmatprep.subr.mxu0 0.0
        %845 = vmatpush1.msra.mxu0 %v822
        %846 = vmatprep.subr.mxu0 0.0
        %847 = vmatpush1.msra.mxu0 0.0
        %848 = vmatprep.subr.mxu0 0.0
        %849 = vmatpush1.msra.mxu0 0.0
        %850 = vmatprep.subr.mxu0 0.0
        %851 = vmatpush1.msra.mxu0 0.0
        %852 = vmatprep.subr.mxu0 0.0
        %853 = vmatpush1.msra.mxu0 0.0
        %854 = vmatprep.subr.mxu0 0.0
        %855 = vmatpush1.msra.mxu0 0.0
        %856 = vmatprep.subr.mxu0 0.0
        %857 = vmatpush1.msra.mxu0 0.0
        %858 = vmatprep.subr.mxu0 0.0
        %859 = vmatpush1.msra.mxu0 0.0
        %860 = vmatprep.subr.mxu0 0.0
        %861 = vmatpush1.msra.mxu0 0.0
        %862 = vmatprep.subr.mxu0 0.0
        %863 = vmatpush1.msra.mxu0 0.0
        %864 = vmatprep.subr.mxu0 0.0
        %865 = vmatpush1.msra.mxu0 0.0
        %866 = vmatprep.subr.mxu0 0.0
        %867 = vmatpush1.msra.mxu0 0.0
        %868 = vmatprep.subr.mxu0 0.0
        %869 = vmatpush1.msra.mxu0 0.0
        %870 = vmatprep.subr.mxu0 0.0
        %871 = vmatpush1.msra.mxu0 0.0
        %872 = vmatprep.subr.mxu0 0.0
        %873 = vmatpush1.msra.mxu0 0.0
        %874 = vmatprep.subr.mxu0 0.0
        %875 = vmatpush1.msra.mxu0 0.0
        %876 = vmatprep.subr.mxu0 0.0
        %877 = vmatpush1.msra.mxu0 0.0
        %878 = vmatprep.subr.mxu0 0.0
        %879 = vmatpush1.msra.mxu0 0.0
        %880 = vmatprep.subr.mxu0 0.0
        %881 = vmatpush1.msra.mxu0 0.0
        %882 = vmatprep.subr.mxu0 0.0
        %883 = vmatpush1.msra.mxu0 0.0
        %884 = vmatprep.subr.mxu0 0.0
        %885 = vmatpush1.msra.mxu0 0.0
        %886 = vmatprep.subr.mxu0 0.0
        %887 = vmatpush1.msra.mxu0 0.0
        %888 = vmatprep.subr.mxu0 0.0
        %889 = vmatpush1.msra.mxu0 0.0
        %890 = vmatprep.subr.mxu0 0.0
        %891 = vmatpush1.msra.mxu0 0.0
        %892 = vmatprep.subr.mxu0 0.0
        %893 = vmatpush1.msra.mxu0 0.0
        %894 = vmatprep.subr.mxu0 0.0
        %895 = vmatpush1.msra.mxu0 0.0
        %896 = vmatprep.subr.mxu0 0.0
        %897 = vmatpush1.msra.mxu0 0.0
        %898 = vmatprep.subr.mxu0 0.0
        %899 = vmatpush1.msra.mxu0 0.0
        %900 = vmatprep.subr.mxu0 0.0
        %901 = vmatpush1.msra.mxu0 0.0
        %902 = vmatprep.mubr.f32.mxu0 0.0
        %903 = vmatmul.mubr.f32.gmra.mrb[0].mxu0 %v381
        %v904 = vpop.f32.mrb[0].mxu0
        %v905 = vadd.f32 0.0, %v904
        %v906 = vpop.f32.mrb[0].mxu0
        %907 = vmatprep.mubr.f32.mxu0 0.0
        %908 = vmatmul.mubr.f32.gmra.mrb[0].mxu0 %v384
        %v909 = vpop.f32.mrb[0].mxu0
        %v910 = vadd.f32 0.0, %v909
        %v911 = vpop.f32.mrb[0].mxu0
        %912 = vmatprep.mubr.f32.mxu0 0.0
        %913 = vmatmul.mubr.f32.gmra.mrb[0].mxu0 %v387
        %v914 = vpop.f32.mrb[0].mxu0
        %v915 = vadd.f32 0.0, %v914
        %v916 = vpop.f32.mrb[0].mxu0
        %917 = vmatprep.mubr.f32.mxu0 0.0
        %918 = vmatmul.mubr.f32.gmra.mrb[0].mxu0 %v390
        %v919 = vpop.f32.mrb[0].mxu0
        %v920 = vadd.f32 0.0, %v919
        %v921 = vpop.f32.mrb[0].mxu0
        %922 = vdwg.mxu0
        %v924 = vsel %vm490, %v837, 0
        %926 = vmatprep.subr.mxu0 0.0
        %927 = vmatpush1.msra.mxu0 %v924
        %928 = vmatprep.subr.mxu0 0.0
        %929 = vmatpush1.msra.mxu0 0.0
        %930 = vmatprep.subr.mxu0 0.0
        %931 = vmatpush1.msra.mxu0 0.0
        %932 = vmatprep.subr.mxu0 0.0
        %933 = vmatpush1.msra.mxu0 0.0
        %934 = vmatprep.subr.mxu0 0.0
        %935 = vmatpush1.msra.mxu0 0.0
        %936 = vmatprep.subr.mxu0 0.0
        %937 = vmatpush1.msra.mxu0 0.0
        %938 = vmatprep.subr.mxu0 0.0
        %939 = vmatpush1.msra.mxu0 0.0
        %940 = vmatprep.subr.mxu0 0.0
        %941 = vmatpush1.msra.mxu0 0.0
        %942 = vmatprep.subr.mxu0 0.0
        %943 = vmatpush1.msra.mxu0 0.0
        %944 = vmatprep.subr.mxu0 0.0
        %945 = vmatpush1.msra.mxu0 0.0
        %946 = vmatprep.subr.mxu0 0.0
        %947 = vmatpush1.msra.mxu0 0.0
        %948 = vmatprep.subr.mxu0 0.0
        %949 = vmatpush1.msra.mxu0 0.0
        %950 = vmatprep.subr.mxu0 0.0
        %951 = vmatpush1.msra.mxu0 0.0
        %952 = vmatprep.subr.mxu0 0.0
        %953 = vmatpush1.msra.mxu0 0.0
        %954 = vmatprep.subr.mxu0 0.0
        %955 = vmatpush1.msra.mxu0 0.0
        %956 = vmatprep.subr.mxu0 0.0
        %957 = vmatpush1.msra.mxu0 0.0
        %958 = vmatprep.subr.mxu0 0.0
        %959 = vmatpush1.msra.mxu0 0.0
        %960 = vmatprep.subr.mxu0 0.0
        %961 = vmatpush1.msra.mxu0 0.0
        %962 = vmatprep.subr.mxu0 0.0
        %963 = vmatpush1.msra.mxu0 0.0
        %964 = vmatprep.subr.mxu0 0.0
        %965 = vmatpush1.msra.mxu0 0.0
        %966 = vmatprep.subr.mxu0 0.0
        %967 = vmatpush1.msra.mxu0 0.0
        %968 = vmatprep.subr.mxu0 0.0
        %969 = vmatpush1.msra.mxu0 0.0
        %970 = vmatprep.subr.mxu0 0.0
        %971 = vmatpush1.msra.mxu0 0.0
        %972 = vmatprep.subr.mxu0 0.0
        %973 = vmatpush1.msra.mxu0 0.0
        %974 = vmatprep.subr.mxu0 0.0
        %975 = vmatpush1.msra.mxu0 0.0
        %976 = vmatprep.subr.mxu0 0.0
        %977 = vmatpush1.msra.mxu0 0.0
        %978 = vmatprep.subr.mxu0 0.0
        %979 = vmatpush1.msra.mxu0 0.0
        %980 = vmatprep.subr.mxu0 0.0
        %981 = vmatpush1.msra.mxu0 0.0
        %982 = vmatprep.subr.mxu0 0.0
        %983 = vmatpush1.msra.mxu0 0.0
        %984 = vmatprep.subr.mxu0 0.0
        %985 = vmatpush1.msra.mxu0 0.0
        %986 = vmatprep.subr.mxu0 0.0
        %987 = vmatpush1.msra.mxu0 0.0
        %988 = vmatprep.subr.mxu0 0.0
        %989 = vmatpush1.msra.mxu0 0.0
        %990 = vmatprep.mubr.f32.mxu0 0.0
        %991 = vmatmul.mubr.f32.gmra.mrb[0].mxu0 %v479
        %v992 = vpop.f32.mrb[0].mxu0
        %v993 = vadd.f32 %v905, %v992
        %v994 = vpop.f32.mrb[0].mxu0
        %995 = vmatprep.mubr.f32.mxu0 0.0
        %996 = vmatmul.mubr.f32.gmra.mrb[0].mxu0 %v482
        %v997 = vpop.f32.mrb[0].mxu0
        %v998 = vadd.f32 %v910, %v997
        %v999 = vpop.f32.mrb[0].mxu0
        %1000 = vmatprep.mubr.f32.mxu0 0.0
        %1001 = vmatmul.mubr.f32.gmra.mrb[0].mxu0 %v485
        %v1002 = vpop.f32.mrb[0].mxu0
        %v1003 = vadd.f32 %v915, %v1002
        %v1004 = vpop.f32.mrb[0].mxu0
        %1005 = vmatprep.mubr.f32.mxu0 0.0
        %1006 = vmatmul.mubr.f32.gmra.mrb[0].mxu0 %v488
        %v1007 = vpop.f32.mrb[0].mxu0
        %v1008 = vadd.f32 %v920, %v1007
        %v1009 = vpop.f32.mrb[0].mxu0
        %1010 = vdwg.mxu0
        %v1011 = vadd.f32 %v993, %v582
        %v1012 = vadd.f32 %v998, %v587
        %v1013 = vadd.f32 %v1003, %v592
        %v1014 = vadd.f32 %v1008, %v597
        %v1015 = vtanh.pop %v1011
        %v1016 = vtanh.pop %v1012
        %v1017 = vtanh.pop %v1013
        %v1018 = vtanh.pop %v1014
        %v1019 = vmul.f32 %v1015, %v610
        %v1020 = vmul.f32 %v1016, %v615
        %v1021 = vmul.f32 %v1017, %v620
        %v1022 = vmul.f32 %v1018, %v625
        %v1023 = vadd.f32 %v1019, %v1020
        %v1024 = vadd.f32 %v1023, %v1021
        %v1025 = vadd.f32 %v1024, %v1022
        %v1026 = vrot.slane %v1025, 4
        %v1027 = vadd.f32 %v1025, %v1026
        %v1028 = vrot.slane %v1027, 2
        %v1029 = vadd.f32 %v1027, %v1028
        %v1030 = vrot.slane %v1029, 1
        %v1031 = vadd.f32 %v1029, %v1030
        %s1032 = scalar_lea.vmem %s317, 12 [#allocation2]
        %v1033 = vld [vmem:[%s1032] sm:$0xf]
        %1034 = vmatprep.subr.mxu0 0.0
        %1035 = vmatpush1.msra.mxu0 %v1015
        %1036 = vmatprep.subr.mxu0 0.0
        %1037 = vmatpush1.msra.mxu0 %v1016
        %1038 = vmatprep.subr.mxu0 0.0
        %1039 = vmatpush1.msra.mxu0 %v1017
        %1040 = vmatprep.subr.mxu0 0.0
        %1041 = vmatpush1.msra.mxu0 %v1018
        %1042 = vmatprep.subr.mxu0 0.0
        %1043 = vmatpush1.msra.mxu0 0.0
        %1044 = vmatprep.subr.mxu0 0.0
        %1045 = vmatpush1.msra.mxu0 0.0
        %1046 = vmatprep.subr.mxu0 0.0
        %1047 = vmatpush1.msra.mxu0 0.0
        %1048 = vmatprep.subr.mxu0 0.0
        %1049 = vmatpush1.msra.mxu0 0.0
        %1050 = vmatprep.subr.mxu0 0.0
        %1051 = vmatpush1.msra.mxu0 0.0
        %1052 = vmatprep.subr.mxu0 0.0
        %1053 = vmatpush1.msra.mxu0 0.0
        %1054 = vmatprep.subr.mxu0 0.0
        %1055 = vmatpush1.msra.mxu0 0.0
        %1056 = vmatprep.subr.mxu0 0.0
        %1057 = vmatpush1.msra.mxu0 0.0
        %1058 = vmatprep.subr.mxu0 0.0
        %1059 = vmatpush1.msra.mxu0 0.0
        %1060 = vmatprep.subr.mxu0 0.0
        %1061 = vmatpush1.msra.mxu0 0.0
        %1062 = vmatprep.subr.mxu0 0.0
        %1063 = vmatpush1.msra.mxu0 0.0
        %1064 = vmatprep.subr.mxu0 0.0
        %1065 = vmatpush1.msra.mxu0 0.0
        %1066 = vmatprep.subr.mxu0 0.0
        %1067 = vmatpush1.msra.mxu0 0.0
        %1068 = vmatprep.subr.mxu0 0.0
        %1069 = vmatpush1.msra.mxu0 0.0
        %1070 = vmatprep.subr.mxu0 0.0
        %1071 = vmatpush1.msra.mxu0 0.0
        %1072 = vmatprep.subr.mxu0 0.0
        %1073 = vmatpush1.msra.mxu0 0.0
        %1074 = vmatprep.subr.mxu0 0.0
        %1075 = vmatpush1.msra.mxu0 0.0
        %1076 = vmatprep.subr.mxu0 0.0
        %1077 = vmatpush1.msra.mxu0 0.0
        %1078 = vmatprep.subr.mxu0 0.0
        %1079 = vmatpush1.msra.mxu0 0.0
        %1080 = vmatprep.subr.mxu0 0.0
        %1081 = vmatpush1.msra.mxu0 0.0
        %1082 = vmatprep.subr.mxu0 0.0
        %1083 = vmatpush1.msra.mxu0 0.0
        %1084 = vmatprep.subr.mxu0 0.0
        %1085 = vmatpush1.msra.mxu0 0.0
        %1086 = vmatprep.subr.mxu0 0.0
        %1087 = vmatpush1.msra.mxu0 0.0
        %1088 = vmatprep.subr.mxu0 0.0
        %1089 = vmatpush1.msra.mxu0 0.0
        %1090 = vmatprep.subr.mxu0 0.0
        %1091 = vmatpush1.msra.mxu0 0.0
        %1092 = vmatprep.subr.mxu0 0.0
        %1093 = vmatpush1.msra.mxu0 0.0
        %1094 = vmatprep.subr.mxu0 0.0
        %1095 = vmatpush1.msra.mxu0 0.0
        %1096 = vmatprep.subr.mxu0 0.0
        %1097 = vmatpush1.msra.mxu0 0.0
        %1098 = vmatprep.mubr.f32.mxu0 0.0
        %1099 = vmatmul.mubr.f32.gmra.mrb[0].mxu0 %v381
        %v1100 = vpop.f32.mrb[0].mxu0
        %v1101 = vadd.f32 0.0, %v1100
        %v1102 = vpop.f32.mrb[0].mxu0
        %1103 = vmatprep.mubr.f32.mxu0 0.0
        %1104 = vmatmul.mubr.f32.gmra.mrb[0].mxu0 %v384
        %v1105 = vpop.f32.mrb[0].mxu0
        %v1106 = vadd.f32 0.0, %v1105
        %v1107 = vpop.f32.mrb[0].mxu0
        %1108 = vmatprep.mubr.f32.mxu0 0.0
        %1109 = vmatmul.mubr.f32.gmra.mrb[0].mxu0 %v387
        %v1110 = vpop.f32.mrb[0].mxu0
        %v1111 = vadd.f32 0.0, %v1110
        %v1112 = vpop.f32.mrb[0].mxu0
        %1113 = vmatprep.mubr.f32.mxu0 0.0
        %1114 = vmatmul.mubr.f32.gmra.mrb[0].mxu0 %v390
        %v1115 = vpop.f32.mrb[0].mxu0
        %v1116 = vadd.f32 0.0, %v1115
        %v1117 = vpop.f32.mrb[0].mxu0
        %1118 = vdwg.mxu0
        %v1120 = vsel %vm490, %v1033, 0
        %1122 = vmatprep.subr.mxu0 0.0
        %1123 = vmatpush1.msra.mxu0 %v1120
        %1124 = vmatprep.subr.mxu0 0.0
        %1125 = vmatpush1.msra.mxu0 0.0
        %1126 = vmatprep.subr.mxu0 0.0
        %1127 = vmatpush1.msra.mxu0 0.0
        %1128 = vmatprep.subr.mxu0 0.0
        %1129 = vmatpush1.msra.mxu0 0.0
        %1130 = vmatprep.subr.mxu0 0.0
        %1131 = vmatpush1.msra.mxu0 0.0
        %1132 = vmatprep.subr.mxu0 0.0
        %1133 = vmatpush1.msra.mxu0 0.0
        %1134 = vmatprep.subr.mxu0 0.0
        %1135 = vmatpush1.msra.mxu0 0.0
        %1136 = vmatprep.subr.mxu0 0.0
        %1137 = vmatpush1.msra.mxu0 0.0
        %1138 = vmatprep.subr.mxu0 0.0
        %1139 = vmatpush1.msra.mxu0 0.0
        %1140 = vmatprep.subr.mxu0 0.0
        %1141 = vmatpush1.msra.mxu0 0.0
        %1142 = vmatprep.subr.mxu0 0.0
        %1143 = vmatpush1.msra.mxu0 0.0
        %1144 = vmatprep.subr.mxu0 0.0
        %1145 = vmatpush1.msra.mxu0 0.0
        %1146 = vmatprep.subr.mxu0 0.0
        %1147 = vmatpush1.msra.mxu0 0.0
        %1148 = vmatprep.subr.mxu0 0.0
        %1149 = vmatpush1.msra.mxu0 0.0
        %1150 = vmatprep.subr.mxu0 0.0
        %1151 = vmatpush1.msra.mxu0 0.0
        %1152 = vmatprep.subr.mxu0 0.0
        %1153 = vmatpush1.msra.mxu0 0.0
        %1154 = vmatprep.subr.mxu0 0.0
        %1155 = vmatpush1.msra.mxu0 0.0
        %1156 = vmatprep.subr.mxu0 0.0
        %1157 = vmatpush1.msra.mxu0 0.0
        %1158 = vmatprep.subr.mxu0 0.0
        %1159 = vmatpush1.msra.mxu0 0.0
        %1160 = vmatprep.subr.mxu0 0.0
        %1161 = vmatpush1.msra.mxu0 0.0
        %1162 = vmatprep.subr.mxu0 0.0
        %1163 = vmatpush1.msra.mxu0 0.0
        %1164 = vmatprep.subr.mxu0 0.0
        %1165 = vmatpush1.msra.mxu0 0.0
        %1166 = vmatprep.subr.mxu0 0.0
        %1167 = vmatpush1.msra.mxu0 0.0
        %1168 = vmatprep.subr.mxu0 0.0
        %1169 = vmatpush1.msra.mxu0 0.0
        %1170 = vmatprep.subr.mxu0 0.0
        %1171 = vmatpush1.msra.mxu0 0.0
        %1172 = vmatprep.subr.mxu0 0.0
        %1173 = vmatpush1.msra.mxu0 0.0
        %1174 = vmatprep.subr.mxu0 0.0
        %1175 = vmatpush1.msra.mxu0 0.0
        %1176 = vmatprep.subr.mxu0 0.0
        %1177 = vmatpush1.msra.mxu0 0.0
        %1178 = vmatprep.subr.mxu0 0.0
        %1179 = vmatpush1.msra.mxu0 0.0
        %1180 = vmatprep.subr.mxu0 0.0
        %1181 = vmatpush1.msra.mxu0 0.0
        %1182 = vmatprep.subr.mxu0 0.0
        %1183 = vmatpush1.msra.mxu0 0.0
        %1184 = vmatprep.subr.mxu0 0.0
        %1185 = vmatpush1.msra.mxu0 0.0
        %1186 = vmatprep.mubr.f32.mxu0 0.0
        %1187 = vmatmul.mubr.f32.gmra.mrb[0].mxu0 %v479
        %v1188 = vpop.f32.mrb[0].mxu0
        %v1189 = vadd.f32 %v1101, %v1188
        %v1190 = vpop.f32.mrb[0].mxu0
        %1191 = vmatprep.mubr.f32.mxu0 0.0
        %1192 = vmatmul.mubr.f32.gmra.mrb[0].mxu0 %v482
        %v1193 = vpop.f32.mrb[0].mxu0
        %v1194 = vadd.f32 %v1106, %v1193
        %v1195 = vpop.f32.mrb[0].mxu0
        %1196 = vmatprep.mubr.f32.mxu0 0.0
        %1197 = vmatmul.mubr.f32.gmra.mrb[0].mxu0 %v485
        %v1198 = vpop.f32.mrb[0].mxu0
        %v1199 = vadd.f32 %v1111, %v1198
        %v1200 = vpop.f32.mrb[0].mxu0
        %1201 = vmatprep.mubr.f32.mxu0 0.0
        %1202 = vmatmul.mubr.f32.gmra.mrb[0].mxu0 %v488
        %v1203 = vpop.f32.mrb[0].mxu0
        %v1204 = vadd.f32 %v1116, %v1203
        %v1205 = vpop.f32.mrb[0].mxu0
        %1206 = vdwg.mxu0
        %v1207 = vadd.f32 %v1189, %v582
        %v1208 = vadd.f32 %v1194, %v587
        %v1209 = vadd.f32 %v1199, %v592
        %v1210 = vadd.f32 %v1204, %v597
        %v1211 = vtanh.pop %v1207
        %v1212 = vtanh.pop %v1208
        %v1213 = vtanh.pop %v1209
        %v1214 = vtanh.pop %v1210
        %v1215 = vmul.f32 %v1211, %v610
        %v1216 = vmul.f32 %v1212, %v615
        %v1217 = vmul.f32 %v1213, %v620
        %v1218 = vmul.f32 %v1214, %v625
        %v1219 = vadd.f32 %v1215, %v1216
        %v1220 = vadd.f32 %v1219, %v1217
        %v1221 = vadd.f32 %v1220, %v1218
        %v1222 = vrot.slane %v1221, 4
        %v1223 = vadd.f32 %v1221, %v1222
        %v1224 = vrot.slane %v1223, 2
        %v1225 = vadd.f32 %v1223, %v1224
        %v1226 = vrot.slane %v1225, 1
        %v1227 = vadd.f32 %v1225, %v1226
        %s1228 = scalar_lea.vmem %s317, 16 [#allocation2]
        %v1229 = vld [vmem:[%s1228] sm:$0xf]
        %1230 = vmatprep.subr.mxu0 0.0
        %1231 = vmatpush1.msra.mxu0 %v1211
        %1232 = vmatprep.subr.mxu0 0.0
        %1233 = vmatpush1.msra.mxu0 %v1212
        %1234 = vmatprep.subr.mxu0 0.0
        %1235 = vmatpush1.msra.mxu0 %v1213
        %1236 = vmatprep.subr.mxu0 0.0
        %1237 = vmatpush1.msra.mxu0 %v1214
        %1238 = vmatprep.subr.mxu0 0.0
        %1239 = vmatpush1.msra.mxu0 0.0
        %1240 = vmatprep.subr.mxu0 0.0
        %1241 = vmatpush1.msra.mxu0 0.0
        %1242 = vmatprep.subr.mxu0 0.0
        %1243 = vmatpush1.msra.mxu0 0.0
        %1244 = vmatprep.subr.mxu0 0.0
        %1245 = vmatpush1.msra.mxu0 0.0
        %1246 = vmatprep.subr.mxu0 0.0
        %1247 = vmatpush1.msra.mxu0 0.0
        %1248 = vmatprep.subr.mxu0 0.0
        %1249 = vmatpush1.msra.mxu0 0.0
        %1250 = vmatprep.subr.mxu0 0.0
        %1251 = vmatpush1.msra.mxu0 0.0
        %1252 = vmatprep.subr.mxu0 0.0
        %1253 = vmatpush1.msra.mxu0 0.0
        %1254 = vmatprep.subr.mxu0 0.0
        %1255 = vmatpush1.msra.mxu0 0.0
        %1256 = vmatprep.subr.mxu0 0.0
        %1257 = vmatpush1.msra.mxu0 0.0
        %1258 = vmatprep.subr.mxu0 0.0
        %1259 = vmatpush1.msra.mxu0 0.0
        %1260 = vmatprep.subr.mxu0 0.0
        %1261 = vmatpush1.msra.mxu0 0.0
        %1262 = vmatprep.subr.mxu0 0.0
        %1263 = vmatpush1.msra.mxu0 0.0
        %1264 = vmatprep.subr.mxu0 0.0
        %1265 = vmatpush1.msra.mxu0 0.0
        %1266 = vmatprep.subr.mxu0 0.0
        %1267 = vmatpush1.msra.mxu0 0.0
        %1268 = vmatprep.subr.mxu0 0.0
        %1269 = vmatpush1.msra.mxu0 0.0
        %1270 = vmatprep.subr.mxu0 0.0
        %1271 = vmatpush1.msra.mxu0 0.0
        %1272 = vmatprep.subr.mxu0 0.0
        %1273 = vmatpush1.msra.mxu0 0.0
        %1274 = vmatprep.subr.mxu0 0.0
        %1275 = vmatpush1.msra.mxu0 0.0
        %1276 = vmatprep.subr.mxu0 0.0
        %1277 = vmatpush1.msra.mxu0 0.0
        %1278 = vmatprep.subr.mxu0 0.0
        %1279 = vmatpush1.msra.mxu0 0.0
        %1280 = vmatprep.subr.mxu0 0.0
        %1281 = vmatpush1.msra.mxu0 0.0
        %1282 = vmatprep.subr.mxu0 0.0
        %1283 = vmatpush1.msra.mxu0 0.0
        %1284 = vmatprep.subr.mxu0 0.0
        %1285 = vmatpush1.msra.mxu0 0.0
        %1286 = vmatprep.subr.mxu0 0.0
        %1287 = vmatpush1.msra.mxu0 0.0
        %1288 = vmatprep.subr.mxu0 0.0
        %1289 = vmatpush1.msra.mxu0 0.0
        %1290 = vmatprep.subr.mxu0 0.0
        %1291 = vmatpush1.msra.mxu0 0.0
        %1292 = vmatprep.subr.mxu0 0.0
        %1293 = vmatpush1.msra.mxu0 0.0
        %1294 = vmatprep.mubr.f32.mxu0 0.0
        %1295 = vmatmul.mubr.f32.gmra.mrb[0].mxu0 %v381
        %v1296 = vpop.f32.mrb[0].mxu0
        %v1297 = vadd.f32 0.0, %v1296
        %v1298 = vpop.f32.mrb[0].mxu0
        %1299 = vmatprep.mubr.f32.mxu0 0.0
        %1300 = vmatmul.mubr.f32.gmra.mrb[0].mxu0 %v384
        %v1301 = vpop.f32.mrb[0].mxu0
        %v1302 = vadd.f32 0.0, %v1301
        %v1303 = vpop.f32.mrb[0].mxu0
        %1304 = vmatprep.mubr.f32.mxu0 0.0
        %1305 = vmatmul.mubr.f32.gmra.mrb[0].mxu0 %v387
        %v1306 = vpop.f32.mrb[0].mxu0
        %v1307 = vadd.f32 0.0, %v1306
        %v1308 = vpop.f32.mrb[0].mxu0
        %1309 = vmatprep.mubr.f32.mxu0 0.0
        %1310 = vmatmul.mubr.f32.gmra.mrb[0].mxu0 %v390
        %v1311 = vpop.f32.mrb[0].mxu0
        %v1312 = vadd.f32 0.0, %v1311
        %v1313 = vpop.f32.mrb[0].mxu0
        %1314 = vdwg.mxu0
        %v1316 = vsel %vm490, %v1229, 0
        %1318 = vmatprep.subr.mxu0 0.0
        %1319 = vmatpush1.msra.mxu0 %v1316
        %1320 = vmatprep.subr.mxu0 0.0
        %1321 = vmatpush1.msra.mxu0 0.0
        %1322 = vmatprep.subr.mxu0 0.0
        %1323 = vmatpush1.msra.mxu0 0.0
        %1324 = vmatprep.subr.mxu0 0.0
        %1325 = vmatpush1.msra.mxu0 0.0
        %1326 = vmatprep.subr.mxu0 0.0
        %1327 = vmatpush1.msra.mxu0 0.0
        %1328 = vmatprep.subr.mxu0 0.0
        %1329 = vmatpush1.msra.mxu0 0.0
        %1330 = vmatprep.subr.mxu0 0.0
        %1331 = vmatpush1.msra.mxu0 0.0
        %1332 = vmatprep.subr.mxu0 0.0
        %1333 = vmatpush1.msra.mxu0 0.0
        %1334 = vmatprep.subr.mxu0 0.0
        %1335 = vmatpush1.msra.mxu0 0.0
        %1336 = vmatprep.subr.mxu0 0.0
        %1337 = vmatpush1.msra.mxu0 0.0
        %1338 = vmatprep.subr.mxu0 0.0
        %1339 = vmatpush1.msra.mxu0 0.0
        %1340 = vmatprep.subr.mxu0 0.0
        %1341 = vmatpush1.msra.mxu0 0.0
        %1342 = vmatprep.subr.mxu0 0.0
        %1343 = vmatpush1.msra.mxu0 0.0
        %1344 = vmatprep.subr.mxu0 0.0
        %1345 = vmatpush1.msra.mxu0 0.0
        %1346 = vmatprep.subr.mxu0 0.0
        %1347 = vmatpush1.msra.mxu0 0.0
        %1348 = vmatprep.subr.mxu0 0.0
        %1349 = vmatpush1.msra.mxu0 0.0
        %1350 = vmatprep.subr.mxu0 0.0
        %1351 = vmatpush1.msra.mxu0 0.0
        %1352 = vmatprep.subr.mxu0 0.0
        %1353 = vmatpush1.msra.mxu0 0.0
        %1354 = vmatprep.subr.mxu0 0.0
        %1355 = vmatpush1.msra.mxu0 0.0
        %1356 = vmatprep.subr.mxu0 0.0
        %1357 = vmatpush1.msra.mxu0 0.0
        %1358 = vmatprep.subr.mxu0 0.0
        %1359 = vmatpush1.msra.mxu0 0.0
        %1360 = vmatprep.subr.mxu0 0.0
        %1361 = vmatpush1.msra.mxu0 0.0
        %1362 = vmatprep.subr.mxu0 0.0
        %1363 = vmatpush1.msra.mxu0 0.0
        %1364 = vmatprep.subr.mxu0 0.0
        %1365 = vmatpush1.msra.mxu0 0.0
        %1366 = vmatprep.subr.mxu0 0.0
        %1367 = vmatpush1.msra.mxu0 0.0
        %1368 = vmatprep.subr.mxu0 0.0
        %1369 = vmatpush1.msra.mxu0 0.0
        %1370 = vmatprep.subr.mxu0 0.0
        %1371 = vmatpush1.msra.mxu0 0.0
        %1372 = vmatprep.subr.mxu0 0.0
        %1373 = vmatpush1.msra.mxu0 0.0
        %1374 = vmatprep.subr.mxu0 0.0
        %1375 = vmatpush1.msra.mxu0 0.0
        %1376 = vmatprep.subr.mxu0 0.0
        %1377 = vmatpush1.msra.mxu0 0.0
        %1378 = vmatprep.subr.mxu0 0.0
        %1379 = vmatpush1.msra.mxu0 0.0
        %1380 = vmatprep.subr.mxu0 0.0
        %1381 = vmatpush1.msra.mxu0 0.0
        %1382 = vmatprep.mubr.f32.mxu0 0.0
        %1383 = vmatmul.mubr.f32.gmra.mrb[0].mxu0 %v479
        %v1384 = vpop.f32.mrb[0].mxu0
        %v1385 = vadd.f32 %v1297, %v1384
        %v1386 = vpop.f32.mrb[0].mxu0
        %1387 = vmatprep.mubr.f32.mxu0 0.0
        %1388 = vmatmul.mubr.f32.gmra.mrb[0].mxu0 %v482
        %v1389 = vpop.f32.mrb[0].mxu0
        %v1390 = vadd.f32 %v1302, %v1389
        %v1391 = vpop.f32.mrb[0].mxu0
        %1392 = vmatprep.mubr.f32.mxu0 0.0
        %1393 = vmatmul.mubr.f32.gmra.mrb[0].mxu0 %v485
        %v1394 = vpop.f32.mrb[0].mxu0
        %v1395 = vadd.f32 %v1307, %v1394
        %v1396 = vpop.f32.mrb[0].mxu0
        %1397 = vmatprep.mubr.f32.mxu0 0.0
        %1398 = vmatmul.mubr.f32.gmra.mrb[0].mxu0 %v488
        %v1399 = vpop.f32.mrb[0].mxu0
        %v1400 = vadd.f32 %v1312, %v1399
        %v1401 = vpop.f32.mrb[0].mxu0
        %1402 = vdwg.mxu0
        %v1403 = vadd.f32 %v1385, %v582
        %v1404 = vadd.f32 %v1390, %v587
        %v1405 = vadd.f32 %v1395, %v592
        %v1406 = vadd.f32 %v1400, %v597
        %v1407 = vtanh.pop %v1403
        %v1408 = vtanh.pop %v1404
        %v1409 = vtanh.pop %v1405
        %v1410 = vtanh.pop %v1406
        %v1411 = vmul.f32 %v1407, %v610
        %v1412 = vmul.f32 %v1408, %v615
        %v1413 = vmul.f32 %v1409, %v620
        %v1414 = vmul.f32 %v1410, %v625
        %v1415 = vadd.f32 %v1411, %v1412
        %v1416 = vadd.f32 %v1415, %v1413
        %v1417 = vadd.f32 %v1416, %v1414
        %v1418 = vrot.slane %v1417, 4
        %v1419 = vadd.f32 %v1417, %v1418
        %v1420 = vrot.slane %v1419, 2
        %v1421 = vadd.f32 %v1419, %v1420
        %v1422 = vrot.slane %v1421, 1
        %v1423 = vadd.f32 %v1421, %v1422
        %s1424 = scalar_lea.vmem %s317, 20 [#allocation2]
        %v1425 = vld [vmem:[%s1424] sm:$0xf]
        %1426 = vmatprep.subr.mxu0 0.0
        %1427 = vmatpush1.msra.mxu0 %v1407
        %1428 = vmatprep.subr.mxu0 0.0
        %1429 = vmatpush1.msra.mxu0 %v1408
        %1430 = vmatprep.subr.mxu0 0.0
        %1431 = vmatpush1.msra.mxu0 %v1409
        %1432 = vmatprep.subr.mxu0 0.0
        %1433 = vmatpush1.msra.mxu0 %v1410
        %1434 = vmatprep.subr.mxu0 0.0
        %1435 = vmatpush1.msra.mxu0 0.0
        %1436 = vmatprep.subr.mxu0 0.0
        %1437 = vmatpush1.msra.mxu0 0.0
        %1438 = vmatprep.subr.mxu0 0.0
        %1439 = vmatpush1.msra.mxu0 0.0
        %1440 = vmatprep.subr.mxu0 0.0
        %1441 = vmatpush1.msra.mxu0 0.0
        %1442 = vmatprep.subr.mxu0 0.0
        %1443 = vmatpush1.msra.mxu0 0.0
        %1444 = vmatprep.subr.mxu0 0.0
        %1445 = vmatpush1.msra.mxu0 0.0
        %1446 = vmatprep.subr.mxu0 0.0
        %1447 = vmatpush1.msra.mxu0 0.0
        %1448 = vmatprep.subr.mxu0 0.0
        %1449 = vmatpush1.msra.mxu0 0.0
        %1450 = vmatprep.subr.mxu0 0.0
        %1451 = vmatpush1.msra.mxu0 0.0
        %1452 = vmatprep.subr.mxu0 0.0
        %1453 = vmatpush1.msra.mxu0 0.0
        %1454 = vmatprep.subr.mxu0 0.0
        %1455 = vmatpush1.msra.mxu0 0.0
        %1456 = vmatprep.subr.mxu0 0.0
        %1457 = vmatpush1.msra.mxu0 0.0
        %1458 = vmatprep.subr.mxu0 0.0
        %1459 = vmatpush1.msra.mxu0 0.0
        %1460 = vmatprep.subr.mxu0 0.0
        %1461 = vmatpush1.msra.mxu0 0.0
        %1462 = vmatprep.subr.mxu0 0.0
        %1463 = vmatpush1.msra.mxu0 0.0
        %1464 = vmatprep.subr.mxu0 0.0
        %1465 = vmatpush1.msra.mxu0 0.0
        %1466 = vmatprep.subr.mxu0 0.0
        %1467 = vmatpush1.msra.mxu0 0.0
        %1468 = vmatprep.subr.mxu0 0.0
        %1469 = vmatpush1.msra.mxu0 0.0
        %1470 = vmatprep.subr.mxu0 0.0
        %1471 = vmatpush1.msra.mxu0 0.0
        %1472 = vmatprep.subr.mxu0 0.0
        %1473 = vmatpush1.msra.mxu0 0.0
        %1474 = vmatprep.subr.mxu0 0.0
        %1475 = vmatpush1.msra.mxu0 0.0
        %1476 = vmatprep.subr.mxu0 0.0
        %1477 = vmatpush1.msra.mxu0 0.0
        %1478 = vmatprep.subr.mxu0 0.0
        %1479 = vmatpush1.msra.mxu0 0.0
        %1480 = vmatprep.subr.mxu0 0.0
        %1481 = vmatpush1.msra.mxu0 0.0
        %1482 = vmatprep.subr.mxu0 0.0
        %1483 = vmatpush1.msra.mxu0 0.0
        %1484 = vmatprep.subr.mxu0 0.0
        %1485 = vmatpush1.msra.mxu0 0.0
        %1486 = vmatprep.subr.mxu0 0.0
        %1487 = vmatpush1.msra.mxu0 0.0
        %1488 = vmatprep.subr.mxu0 0.0
        %1489 = vmatpush1.msra.mxu0 0.0
        %1490 = vmatprep.mubr.f32.mxu0 0.0
        %1491 = vmatmul.mubr.f32.gmra.mrb[0].mxu0 %v381
        %v1492 = vpop.f32.mrb[0].mxu0
        %v1493 = vadd.f32 0.0, %v1492
        %v1494 = vpop.f32.mrb[0].mxu0
        %1495 = vmatprep.mubr.f32.mxu0 0.0
        %1496 = vmatmul.mubr.f32.gmra.mrb[0].mxu0 %v384
        %v1497 = vpop.f32.mrb[0].mxu0
        %v1498 = vadd.f32 0.0, %v1497
        %v1499 = vpop.f32.mrb[0].mxu0
        %1500 = vmatprep.mubr.f32.mxu0 0.0
        %1501 = vmatmul.mubr.f32.gmra.mrb[0].mxu0 %v387
        %v1502 = vpop.f32.mrb[0].mxu0
        %v1503 = vadd.f32 0.0, %v1502
        %v1504 = vpop.f32.mrb[0].mxu0
        %1505 = vmatprep.mubr.f32.mxu0 0.0
        %1506 = vmatmul.mubr.f32.gmra.mrb[0].mxu0 %v390
        %v1507 = vpop.f32.mrb[0].mxu0
        %v1508 = vadd.f32 0.0, %v1507
        %v1509 = vpop.f32.mrb[0].mxu0
        %1510 = vdwg.mxu0
        %v1512 = vsel %vm490, %v1425, 0
        %1514 = vmatprep.subr.mxu0 0.0
        %1515 = vmatpush1.msra.mxu0 %v1512
        %1516 = vmatprep.subr.mxu0 0.0
        %1517 = vmatpush1.msra.mxu0 0.0
        %1518 = vmatprep.subr.mxu0 0.0
        %1519 = vmatpush1.msra.mxu0 0.0
        %1520 = vmatprep.subr.mxu0 0.0
        %1521 = vmatpush1.msra.mxu0 0.0
        %1522 = vmatprep.subr.mxu0 0.0
        %1523 = vmatpush1.msra.mxu0 0.0
        %1524 = vmatprep.subr.mxu0 0.0
        %1525 = vmatpush1.msra.mxu0 0.0
        %1526 = vmatprep.subr.mxu0 0.0
        %1527 = vmatpush1.msra.mxu0 0.0
        %1528 = vmatprep.subr.mxu0 0.0
        %1529 = vmatpush1.msra.mxu0 0.0
        %1530 = vmatprep.subr.mxu0 0.0
        %1531 = vmatpush1.msra.mxu0 0.0
        %1532 = vmatprep.subr.mxu0 0.0
        %1533 = vmatpush1.msra.mxu0 0.0
        %1534 = vmatprep.subr.mxu0 0.0
        %1535 = vmatpush1.msra.mxu0 0.0
        %1536 = vmatprep.subr.mxu0 0.0
        %1537 = vmatpush1.msra.mxu0 0.0
        %1538 = vmatprep.subr.mxu0 0.0
        %1539 = vmatpush1.msra.mxu0 0.0
        %1540 = vmatprep.subr.mxu0 0.0
        %1541 = vmatpush1.msra.mxu0 0.0
        %1542 = vmatprep.subr.mxu0 0.0
        %1543 = vmatpush1.msra.mxu0 0.0
        %1544 = vmatprep.subr.mxu0 0.0
        %1545 = vmatpush1.msra.mxu0 0.0
        %1546 = vmatprep.subr.mxu0 0.0
        %1547 = vmatpush1.msra.mxu0 0.0
        %1548 = vmatprep.subr.mxu0 0.0
        %1549 = vmatpush1.msra.mxu0 0.0
        %1550 = vmatprep.subr.mxu0 0.0
        %1551 = vmatpush1.msra.mxu0 0.0
        %1552 = vmatprep.subr.mxu0 0.0
        %1553 = vmatpush1.msra.mxu0 0.0
        %1554 = vmatprep.subr.mxu0 0.0
        %1555 = vmatpush1.msra.mxu0 0.0
        %1556 = vmatprep.subr.mxu0 0.0
        %1557 = vmatpush1.msra.mxu0 0.0
        %1558 = vmatprep.subr.mxu0 0.0
        %1559 = vmatpush1.msra.mxu0 0.0
        %1560 = vmatprep.subr.mxu0 0.0
        %1561 = vmatpush1.msra.mxu0 0.0
        %1562 = vmatprep.subr.mxu0 0.0
        %1563 = vmatpush1.msra.mxu0 0.0
        %1564 = vmatprep.subr.mxu0 0.0
        %1565 = vmatpush1.msra.mxu0 0.0
        %1566 = vmatprep.subr.mxu0 0.0
        %1567 = vmatpush1.msra.mxu0 0.0
        %1568 = vmatprep.subr.mxu0 0.0
        %1569 = vmatpush1.msra.mxu0 0.0
        %1570 = vmatprep.subr.mxu0 0.0
        %1571 = vmatpush1.msra.mxu0 0.0
        %1572 = vmatprep.subr.mxu0 0.0
        %1573 = vmatpush1.msra.mxu0 0.0
        %1574 = vmatprep.subr.mxu0 0.0
        %1575 = vmatpush1.msra.mxu0 0.0
        %1576 = vmatprep.subr.mxu0 0.0
        %1577 = vmatpush1.msra.mxu0 0.0
        %1578 = vmatprep.mubr.f32.mxu0 0.0
        %1579 = vmatmul.mubr.f32.gmra.mrb[0].mxu0 %v479
        %v1580 = vpop.f32.mrb[0].mxu0
        %v1581 = vadd.f32 %v1493, %v1580
        %v1582 = vpop.f32.mrb[0].mxu0
        %1583 = vmatprep.mubr.f32.mxu0 0.0
        %1584 = vmatmul.mubr.f32.gmra.mrb[0].mxu0 %v482
        %v1585 = vpop.f32.mrb[0].mxu0
        %v1586 = vadd.f32 %v1498, %v1585
        %v1587 = vpop.f32.mrb[0].mxu0
        %1588 = vmatprep.mubr.f32.mxu0 0.0
        %1589 = vmatmul.mubr.f32.gmra.mrb[0].mxu0 %v485
        %v1590 = vpop.f32.mrb[0].mxu0
        %v1591 = vadd.f32 %v1503, %v1590
        %v1592 = vpop.f32.mrb[0].mxu0
        %1593 = vmatprep.mubr.f32.mxu0 0.0
        %1594 = vmatmul.mubr.f32.gmra.mrb[0].mxu0 %v488
        %v1595 = vpop.f32.mrb[0].mxu0
        %v1596 = vadd.f32 %v1508, %v1595
        %v1597 = vpop.f32.mrb[0].mxu0
        %1598 = vdwg.mxu0
        %v1599 = vadd.f32 %v1581, %v582
        %v1600 = vadd.f32 %v1586, %v587
        %v1601 = vadd.f32 %v1591, %v592
        %v1602 = vadd.f32 %v1596, %v597
        %v1603 = vtanh.pop %v1599
        %v1604 = vtanh.pop %v1600
        %v1605 = vtanh.pop %v1601
        %v1606 = vtanh.pop %v1602
        %v1607 = vmul.f32 %v1603, %v610
        %v1608 = vmul.f32 %v1604, %v615
        %v1609 = vmul.f32 %v1605, %v620
        %v1610 = vmul.f32 %v1606, %v625
        %v1611 = vadd.f32 %v1607, %v1608
        %v1612 = vadd.f32 %v1611, %v1609
        %v1613 = vadd.f32 %v1612, %v1610
        %v1614 = vrot.slane %v1613, 4
        %v1615 = vadd.f32 %v1613, %v1614
        %v1616 = vrot.slane %v1615, 2
        %v1617 = vadd.f32 %v1615, %v1616
        %v1618 = vrot.slane %v1617, 1
        %v1619 = vadd.f32 %v1617, %v1618
        %s1620 = scalar_lea.vmem %s317, 24 [#allocation2]
        %v1621 = vld [vmem:[%s1620] sm:$0xf]
        %1622 = vmatprep.subr.mxu0 0.0
        %1623 = vmatpush1.msra.mxu0 %v1603
        %1624 = vmatprep.subr.mxu0 0.0
        %1625 = vmatpush1.msra.mxu0 %v1604
        %1626 = vmatprep.subr.mxu0 0.0
        %1627 = vmatpush1.msra.mxu0 %v1605
        %1628 = vmatprep.subr.mxu0 0.0
        %1629 = vmatpush1.msra.mxu0 %v1606
        %1630 = vmatprep.subr.mxu0 0.0
        %1631 = vmatpush1.msra.mxu0 0.0
        %1632 = vmatprep.subr.mxu0 0.0
        %1633 = vmatpush1.msra.mxu0 0.0
        %1634 = vmatprep.subr.mxu0 0.0
        %1635 = vmatpush1.msra.mxu0 0.0
        %1636 = vmatprep.subr.mxu0 0.0
        %1637 = vmatpush1.msra.mxu0 0.0
        %1638 = vmatprep.subr.mxu0 0.0
        %1639 = vmatpush1.msra.mxu0 0.0
        %1640 = vmatprep.subr.mxu0 0.0
        %1641 = vmatpush1.msra.mxu0 0.0
        %1642 = vmatprep.subr.mxu0 0.0
        %1643 = vmatpush1.msra.mxu0 0.0
        %1644 = vmatprep.subr.mxu0 0.0
        %1645 = vmatpush1.msra.mxu0 0.0
        %1646 = vmatprep.subr.mxu0 0.0
        %1647 = vmatpush1.msra.mxu0 0.0
        %1648 = vmatprep.subr.mxu0 0.0
        %1649 = vmatpush1.msra.mxu0 0.0
        %1650 = vmatprep.subr.mxu0 0.0
        %1651 = vmatpush1.msra.mxu0 0.0
        %1652 = vmatprep.subr.mxu0 0.0
        %1653 = vmatpush1.msra.mxu0 0.0
        %1654 = vmatprep.subr.mxu0 0.0
        %1655 = vmatpush1.msra.mxu0 0.0
        %1656 = vmatprep.subr.mxu0 0.0
        %1657 = vmatpush1.msra.mxu0 0.0
        %1658 = vmatprep.subr.mxu0 0.0
        %1659 = vmatpush1.msra.mxu0 0.0
        %1660 = vmatprep.subr.mxu0 0.0
        %1661 = vmatpush1.msra.mxu0 0.0
        %1662 = vmatprep.subr.mxu0 0.0
        %1663 = vmatpush1.msra.mxu0 0.0
        %1664 = vmatprep.subr.mxu0 0.0
        %1665 = vmatpush1.msra.mxu0 0.0
        %1666 = vmatprep.subr.mxu0 0.0
        %1667 = vmatpush1.msra.mxu0 0.0
        %1668 = vmatprep.subr.mxu0 0.0
        %1669 = vmatpush1.msra.mxu0 0.0
        %1670 = vmatprep.subr.mxu0 0.0
        %1671 = vmatpush1.msra.mxu0 0.0
        %1672 = vmatprep.subr.mxu0 0.0
        %1673 = vmatpush1.msra.mxu0 0.0
        %1674 = vmatprep.subr.mxu0 0.0
        %1675 = vmatpush1.msra.mxu0 0.0
        %1676 = vmatprep.subr.mxu0 0.0
        %1677 = vmatpush1.msra.mxu0 0.0
        %1678 = vmatprep.subr.mxu0 0.0
        %1679 = vmatpush1.msra.mxu0 0.0
        %1680 = vmatprep.subr.mxu0 0.0
        %1681 = vmatpush1.msra.mxu0 0.0
        %1682 = vmatprep.subr.mxu0 0.0
        %1683 = vmatpush1.msra.mxu0 0.0
        %1684 = vmatprep.subr.mxu0 0.0
        %1685 = vmatpush1.msra.mxu0 0.0
        %1686 = vmatprep.mubr.f32.mxu0 0.0
        %1687 = vmatmul.mubr.f32.gmra.mrb[0].mxu0 %v381
        %v1688 = vpop.f32.mrb[0].mxu0
        %v1689 = vadd.f32 0.0, %v1688
        %v1690 = vpop.f32.mrb[0].mxu0
        %1691 = vmatprep.mubr.f32.mxu0 0.0
        %1692 = vmatmul.mubr.f32.gmra.mrb[0].mxu0 %v384
        %v1693 = vpop.f32.mrb[0].mxu0
        %v1694 = vadd.f32 0.0, %v1693
        %v1695 = vpop.f32.mrb[0].mxu0
        %1696 = vmatprep.mubr.f32.mxu0 0.0
        %1697 = vmatmul.mubr.f32.gmra.mrb[0].mxu0 %v387
        %v1698 = vpop.f32.mrb[0].mxu0
        %v1699 = vadd.f32 0.0, %v1698
        %v1700 = vpop.f32.mrb[0].mxu0
        %1701 = vmatprep.mubr.f32.mxu0 0.0
        %1702 = vmatmul.mubr.f32.gmra.mrb[0].mxu0 %v390
        %v1703 = vpop.f32.mrb[0].mxu0
        %v1704 = vadd.f32 0.0, %v1703
        %v1705 = vpop.f32.mrb[0].mxu0
        %1706 = vdwg.mxu0
        %v1708 = vsel %vm490, %v1621, 0
        %1710 = vmatprep.subr.mxu0 0.0
        %1711 = vmatpush1.msra.mxu0 %v1708
        %1712 = vmatprep.subr.mxu0 0.0
        %1713 = vmatpush1.msra.mxu0 0.0
        %1714 = vmatprep.subr.mxu0 0.0
        %1715 = vmatpush1.msra.mxu0 0.0
        %1716 = vmatprep.subr.mxu0 0.0
        %1717 = vmatpush1.msra.mxu0 0.0
        %1718 = vmatprep.subr.mxu0 0.0
        %1719 = vmatpush1.msra.mxu0 0.0
        %1720 = vmatprep.subr.mxu0 0.0
        %1721 = vmatpush1.msra.mxu0 0.0
        %1722 = vmatprep.subr.mxu0 0.0
        %1723 = vmatpush1.msra.mxu0 0.0
        %1724 = vmatprep.subr.mxu0 0.0
        %1725 = vmatpush1.msra.mxu0 0.0
        %1726 = vmatprep.subr.mxu0 0.0
        %1727 = vmatpush1.msra.mxu0 0.0
        %1728 = vmatprep.subr.mxu0 0.0
        %1729 = vmatpush1.msra.mxu0 0.0
        %1730 = vmatprep.subr.mxu0 0.0
        %1731 = vmatpush1.msra.mxu0 0.0
        %1732 = vmatprep.subr.mxu0 0.0
        %1733 = vmatpush1.msra.mxu0 0.0
        %1734 = vmatprep.subr.mxu0 0.0
        %1735 = vmatpush1.msra.mxu0 0.0
        %1736 = vmatprep.subr.mxu0 0.0
        %1737 = vmatpush1.msra.mxu0 0.0
        %1738 = vmatprep.subr.mxu0 0.0
        %1739 = vmatpush1.msra.mxu0 0.0
        %1740 = vmatprep.subr.mxu0 0.0
        %1741 = vmatpush1.msra.mxu0 0.0
        %1742 = vmatprep.subr.mxu0 0.0
        %1743 = vmatpush1.msra.mxu0 0.0
        %1744 = vmatprep.subr.mxu0 0.0
        %1745 = vmatpush1.msra.mxu0 0.0
        %1746 = vmatprep.subr.mxu0 0.0
        %1747 = vmatpush1.msra.mxu0 0.0
        %1748 = vmatprep.subr.mxu0 0.0
        %1749 = vmatpush1.msra.mxu0 0.0
        %1750 = vmatprep.subr.mxu0 0.0
        %1751 = vmatpush1.msra.mxu0 0.0
        %1752 = vmatprep.subr.mxu0 0.0
        %1753 = vmatpush1.msra.mxu0 0.0
        %1754 = vmatprep.subr.mxu0 0.0
        %1755 = vmatpush1.msra.mxu0 0.0
        %1756 = vmatprep.subr.mxu0 0.0
        %1757 = vmatpush1.msra.mxu0 0.0
        %1758 = vmatprep.subr.mxu0 0.0
        %1759 = vmatpush1.msra.mxu0 0.0
        %1760 = vmatprep.subr.mxu0 0.0
        %1761 = vmatpush1.msra.mxu0 0.0
        %1762 = vmatprep.subr.mxu0 0.0
        %1763 = vmatpush1.msra.mxu0 0.0
        %1764 = vmatprep.subr.mxu0 0.0
        %1765 = vmatpush1.msra.mxu0 0.0
        %1766 = vmatprep.subr.mxu0 0.0
        %1767 = vmatpush1.msra.mxu0 0.0
        %1768 = vmatprep.subr.mxu0 0.0
        %1769 = vmatpush1.msra.mxu0 0.0
        %1770 = vmatprep.subr.mxu0 0.0
        %1771 = vmatpush1.msra.mxu0 0.0
        %1772 = vmatprep.subr.mxu0 0.0
        %1773 = vmatpush1.msra.mxu0 0.0
        %1774 = vmatprep.mubr.f32.mxu0 0.0
        %1775 = vmatmul.mubr.f32.gmra.mrb[0].mxu0 %v479
        %v1776 = vpop.f32.mrb[0].mxu0
        %v1777 = vadd.f32 %v1689, %v1776
        %v1778 = vpop.f32.mrb[0].mxu0
        %1779 = vmatprep.mubr.f32.mxu0 0.0
        %1780 = vmatmul.mubr.f32.gmra.mrb[0].mxu0 %v482
        %v1781 = vpop.f32.mrb[0].mxu0
        %v1782 = vadd.f32 %v1694, %v1781
        %v1783 = vpop.f32.mrb[0].mxu0
        %1784 = vmatprep.mubr.f32.mxu0 0.0
        %1785 = vmatmul.mubr.f32.gmra.mrb[0].mxu0 %v485
        %v1786 = vpop.f32.mrb[0].mxu0
        %v1787 = vadd.f32 %v1699, %v1786
        %v1788 = vpop.f32.mrb[0].mxu0
        %1789 = vmatprep.mubr.f32.mxu0 0.0
        %1790 = vmatmul.mubr.f32.gmra.mrb[0].mxu0 %v488
        %v1791 = vpop.f32.mrb[0].mxu0
        %v1792 = vadd.f32 %v1704, %v1791
        %v1793 = vpop.f32.mrb[0].mxu0
        %1794 = vdwg.mxu0
        %v1795 = vadd.f32 %v1777, %v582
        %v1796 = vadd.f32 %v1782, %v587
        %v1797 = vadd.f32 %v1787, %v592
        %v1798 = vadd.f32 %v1792, %v597
        %v1799 = vtanh.pop %v1795
        %v1800 = vtanh.pop %v1796
        %v1801 = vtanh.pop %v1797
        %v1802 = vtanh.pop %v1798
        %v1803 = vmul.f32 %v1799, %v610
        %v1804 = vmul.f32 %v1800, %v615
        %v1805 = vmul.f32 %v1801, %v620
        %v1806 = vmul.f32 %v1802, %v625
        %v1807 = vadd.f32 %v1803, %v1804
        %v1808 = vadd.f32 %v1807, %v1805
        %v1809 = vadd.f32 %v1808, %v1806
        %v1810 = vrot.slane %v1809, 4
        %v1811 = vadd.f32 %v1809, %v1810
        %v1812 = vrot.slane %v1811, 2
        %v1813 = vadd.f32 %v1811, %v1812
        %v1814 = vrot.slane %v1813, 1
        %v1815 = vadd.f32 %v1813, %v1814
        %s1816 = scalar_lea.vmem %s317, 28 [#allocation2]
        %v1817 = vld [vmem:[%s1816] sm:$0xf]
        %1818 = vmatprep.subr.mxu0 0.0
        %1819 = vmatpush1.msra.mxu0 %v1799
        %1820 = vmatprep.subr.mxu0 0.0
        %1821 = vmatpush1.msra.mxu0 %v1800
        %1822 = vmatprep.subr.mxu0 0.0
        %1823 = vmatpush1.msra.mxu0 %v1801
        %1824 = vmatprep.subr.mxu0 0.0
        %1825 = vmatpush1.msra.mxu0 %v1802
        %1826 = vmatprep.subr.mxu0 0.0
        %1827 = vmatpush1.msra.mxu0 0.0
        %1828 = vmatprep.subr.mxu0 0.0
        %1829 = vmatpush1.msra.mxu0 0.0
        %1830 = vmatprep.subr.mxu0 0.0
        %1831 = vmatpush1.msra.mxu0 0.0
        %1832 = vmatprep.subr.mxu0 0.0
        %1833 = vmatpush1.msra.mxu0 0.0
        %1834 = vmatprep.subr.mxu0 0.0
        %1835 = vmatpush1.msra.mxu0 0.0
        %1836 = vmatprep.subr.mxu0 0.0
        %1837 = vmatpush1.msra.mxu0 0.0
        %1838 = vmatprep.subr.mxu0 0.0
        %1839 = vmatpush1.msra.mxu0 0.0
        %1840 = vmatprep.subr.mxu0 0.0
        %1841 = vmatpush1.msra.mxu0 0.0
        %1842 = vmatprep.subr.mxu0 0.0
        %1843 = vmatpush1.msra.mxu0 0.0
        %1844 = vmatprep.subr.mxu0 0.0
        %1845 = vmatpush1.msra.mxu0 0.0
        %1846 = vmatprep.subr.mxu0 0.0
        %1847 = vmatpush1.msra.mxu0 0.0
        %1848 = vmatprep.subr.mxu0 0.0
        %1849 = vmatpush1.msra.mxu0 0.0
        %1850 = vmatprep.subr.mxu0 0.0
        %1851 = vmatpush1.msra.mxu0 0.0
        %1852 = vmatprep.subr.mxu0 0.0
        %1853 = vmatpush1.msra.mxu0 0.0
        %1854 = vmatprep.subr.mxu0 0.0
        %1855 = vmatpush1.msra.mxu0 0.0
        %1856 = vmatprep.subr.mxu0 0.0
        %1857 = vmatpush1.msra.mxu0 0.0
        %1858 = vmatprep.subr.mxu0 0.0
        %1859 = vmatpush1.msra.mxu0 0.0
        %1860 = vmatprep.subr.mxu0 0.0
        %1861 = vmatpush1.msra.mxu0 0.0
        %1862 = vmatprep.subr.mxu0 0.0
        %1863 = vmatpush1.msra.mxu0 0.0
        %1864 = vmatprep.subr.mxu0 0.0
        %1865 = vmatpush1.msra.mxu0 0.0
        %1866 = vmatprep.subr.mxu0 0.0
        %1867 = vmatpush1.msra.mxu0 0.0
        %1868 = vmatprep.subr.mxu0 0.0
        %1869 = vmatpush1.msra.mxu0 0.0
        %1870 = vmatprep.subr.mxu0 0.0
        %1871 = vmatpush1.msra.mxu0 0.0
        %1872 = vmatprep.subr.mxu0 0.0
        %1873 = vmatpush1.msra.mxu0 0.0
        %1874 = vmatprep.subr.mxu0 0.0
        %1875 = vmatpush1.msra.mxu0 0.0
        %1876 = vmatprep.subr.mxu0 0.0
        %1877 = vmatpush1.msra.mxu0 0.0
        %1878 = vmatprep.subr.mxu0 0.0
        %1879 = vmatpush1.msra.mxu0 0.0
        %1880 = vmatprep.subr.mxu0 0.0
        %1881 = vmatpush1.msra.mxu0 0.0
        %1882 = vmatprep.mubr.f32.mxu0 0.0
        %1883 = vmatmul.mubr.f32.gmra.mrb[0].mxu0 %v381
        %v1884 = vpop.f32.mrb[0].mxu0
        %v1885 = vadd.f32 0.0, %v1884
        %v1886 = vpop.f32.mrb[0].mxu0
        %1887 = vmatprep.mubr.f32.mxu0 0.0
        %1888 = vmatmul.mubr.f32.gmra.mrb[0].mxu0 %v384
        %v1889 = vpop.f32.mrb[0].mxu0
        %v1890 = vadd.f32 0.0, %v1889
        %v1891 = vpop.f32.mrb[0].mxu0
        %1892 = vmatprep.mubr.f32.mxu0 0.0
        %1893 = vmatmul.mubr.f32.gmra.mrb[0].mxu0 %v387
        %v1894 = vpop.f32.mrb[0].mxu0
        %v1895 = vadd.f32 0.0, %v1894
        %v1896 = vpop.f32.mrb[0].mxu0
        %1897 = vmatprep.mubr.f32.mxu0 0.0
        %1898 = vmatmul.mubr.f32.gmra.mrb[0].mxu0 %v390
        %v1899 = vpop.f32.mrb[0].mxu0
        %v1900 = vadd.f32 0.0, %v1899
        %v1901 = vpop.f32.mrb[0].mxu0
        %1902 = vdwg.mxu0
        %v1904 = vsel %vm490, %v1817, 0
        %1906 = vmatprep.subr.mxu0 0.0
        %1907 = vmatpush1.msra.mxu0 %v1904
        %1908 = vmatprep.subr.mxu0 0.0
        %1909 = vmatpush1.msra.mxu0 0.0
        %1910 = vmatprep.subr.mxu0 0.0
        %1911 = vmatpush1.msra.mxu0 0.0
        %1912 = vmatprep.subr.mxu0 0.0
        %1913 = vmatpush1.msra.mxu0 0.0
        %1914 = vmatprep.subr.mxu0 0.0
        %1915 = vmatpush1.msra.mxu0 0.0
        %1916 = vmatprep.subr.mxu0 0.0
        %1917 = vmatpush1.msra.mxu0 0.0
        %1918 = vmatprep.subr.mxu0 0.0
        %1919 = vmatpush1.msra.mxu0 0.0
        %1920 = vmatprep.subr.mxu0 0.0
        %1921 = vmatpush1.msra.mxu0 0.0
        %1922 = vmatprep.subr.mxu0 0.0
        %1923 = vmatpush1.msra.mxu0 0.0
        %1924 = vmatprep.subr.mxu0 0.0
        %1925 = vmatpush1.msra.mxu0 0.0
        %1926 = vmatprep.subr.mxu0 0.0
        %1927 = vmatpush1.msra.mxu0 0.0
        %1928 = vmatprep.subr.mxu0 0.0
        %1929 = vmatpush1.msra.mxu0 0.0
        %1930 = vmatprep.subr.mxu0 0.0
        %1931 = vmatpush1.msra.mxu0 0.0
        %1932 = vmatprep.subr.mxu0 0.0
        %1933 = vmatpush1.msra.mxu0 0.0
        %1934 = vmatprep.subr.mxu0 0.0
        %1935 = vmatpush1.msra.mxu0 0.0
        %1936 = vmatprep.subr.mxu0 0.0
        %1937 = vmatpush1.msra.mxu0 0.0
        %1938 = vmatprep.subr.mxu0 0.0
        %1939 = vmatpush1.msra.mxu0 0.0
        %1940 = vmatprep.subr.mxu0 0.0
        %1941 = vmatpush1.msra.mxu0 0.0
        %1942 = vmatprep.subr.mxu0 0.0
        %1943 = vmatpush1.msra.mxu0 0.0
        %1944 = vmatprep.subr.mxu0 0.0
        %1945 = vmatpush1.msra.mxu0 0.0
        %1946 = vmatprep.subr.mxu0 0.0
        %1947 = vmatpush1.msra.mxu0 0.0
        %1948 = vmatprep.subr.mxu0 0.0
        %1949 = vmatpush1.msra.mxu0 0.0
        %1950 = vmatprep.subr.mxu0 0.0
        %1951 = vmatpush1.msra.mxu0 0.0
        %1952 = vmatprep.subr.mxu0 0.0
        %1953 = vmatpush1.msra.mxu0 0.0
        %1954 = vmatprep.subr.mxu0 0.0
        %1955 = vmatpush1.msra.mxu0 0.0
        %1956 = vmatprep.subr.mxu0 0.0
        %1957 = vmatpush1.msra.mxu0 0.0
        %1958 = vmatprep.subr.mxu0 0.0
        %1959 = vmatpush1.msra.mxu0 0.0
        %1960 = vmatprep.subr.mxu0 0.0
        %1961 = vmatpush1.msra.mxu0 0.0
        %1962 = vmatprep.subr.mxu0 0.0
        %1963 = vmatpush1.msra.mxu0 0.0
        %1964 = vmatprep.subr.mxu0 0.0
        %1965 = vmatpush1.msra.mxu0 0.0
        %1966 = vmatprep.subr.mxu0 0.0
        %1967 = vmatpush1.msra.mxu0 0.0
        %1968 = vmatprep.subr.mxu0 0.0
        %1969 = vmatpush1.msra.mxu0 0.0
        %1970 = vmatprep.mubr.f32.mxu0 0.0
        %1971 = vmatmul.mubr.f32.gmra.mrb[0].mxu0 %v479
        %v1972 = vpop.f32.mrb[0].mxu0
        %v1973 = vadd.f32 %v1885, %v1972
        %v1974 = vpop.f32.mrb[0].mxu0
        %1975 = vmatprep.mubr.f32.mxu0 0.0
        %1976 = vmatmul.mubr.f32.gmra.mrb[0].mxu0 %v482
        %v1977 = vpop.f32.mrb[0].mxu0
        %v1978 = vadd.f32 %v1890, %v1977
        %v1979 = vpop.f32.mrb[0].mxu0
        %1980 = vmatprep.mubr.f32.mxu0 0.0
        %1981 = vmatmul.mubr.f32.gmra.mrb[0].mxu0 %v485
        %v1982 = vpop.f32.mrb[0].mxu0
        %v1983 = vadd.f32 %v1895, %v1982
        %v1984 = vpop.f32.mrb[0].mxu0
        %1985 = vmatprep.mubr.f32.mxu0 0.0
        %1986 = vmatmul.mubr.f32.gmra.mrb[0].mxu0 %v488
        %v1987 = vpop.f32.mrb[0].mxu0
        %v1988 = vadd.f32 %v1900, %v1987
        %v1989 = vpop.f32.mrb[0].mxu0
        %1990 = vdwg.mxu0
        %v1991 = vadd.f32 %v1973, %v582
        %v1992 = vadd.f32 %v1978, %v587
        %v1993 = vadd.f32 %v1983, %v592
        %v1994 = vadd.f32 %v1988, %v597
        %v1995 = vtanh.pop %v1991
        %v1996 = vtanh.pop %v1992
        %v1997 = vtanh.pop %v1993
        %v1998 = vtanh.pop %v1994
        %v1999 = vmul.f32 %v1995, %v610
        %v2000 = vmul.f32 %v1996, %v615
        %v2001 = vmul.f32 %v1997, %v620
        %v2002 = vmul.f32 %v1998, %v625
        %v2003 = vadd.f32 %v1999, %v2000
        %v2004 = vadd.f32 %v2003, %v2001
        %v2005 = vadd.f32 %v2004, %v2002
        %v2006 = vrot.slane %v2005, 4
        %v2007 = vadd.f32 %v2005, %v2006
        %v2008 = vrot.slane %v2007, 2
        %v2009 = vadd.f32 %v2007, %v2008
        %v2010 = vrot.slane %v2009, 1
        %v2011 = vadd.f32 %v2009, %v2010
        %vm2012 = vcmask 1040384
        %v2013 = vsel %vm2012, %v639, %v835
        %vm2014 = vcmask 1041408
        %v2015 = vsel %vm2014, %v2013, %v1031
        %vm2016 = vcmask 1042432
        %v2017 = vsel %vm2016, %v2015, %v1227
        %v2018 = vsel %vm490, %v2017, %v1423
        %vm2019 = vcmask 1044480
        %v2020 = vsel %vm2019, %v2018, %v1619
        %vm2021 = vcmask 1045504
        %v2022 = vsel %vm2021, %v2020, %v1815
        %vm2023 = vcmask 1046528
        %v2024 = vsel %vm2023, %v2022, %v2011
        %v2025 = vxor.u32 %v2024, 2147483648
        %v2026 = vmul.f32 %v2025, 1.442695
        %v2027 = vpow.pop %v2026
        %v2028 = vadd.f32 %v2027, 1.0
        %v2029 = vrcp.pop %v2028
        %v2030 = vmul.f32 1.0, %v2029
        %2031 = vst [vmem:[%s357] sm:$0xff] %v2030
        %s2032 = sand.u32 %s167, 1
        %s2033 = scalar_lea.sflag [#allocation5], %s2032
        %s2034 = sand.u32 %s167, 1
        %s2035 = smul.addr %s2034, 8
        %s2036 = scalar_lea.vmem [#allocation6], %s2035
        // Predicated region
        $region90: #{tpu_custom_call.1} parent=80 // pred_check
          %p2037 = pneg %p177
        $region91: #{tpu_custom_call.1} parent=80 // pred_check_branch
          %2039 = sbr.rel (%p2037) target = $region93
        $region92: #{tpu_custom_call.1} parent=80 // pred_region
          %s2041 = ssub.s32 128, 128
          %2042 = vsyncadd %s2033, %s2041
          %s2043 = smul.addr %s23, 128
          %s2044 = scalar_lea.hbm %s6, %s2043
          %s2046 = sshll.u32 %s2036, 4
          %s2047 = int_to_ptr.vmem [resolvable:$true] %s2046
          %2049 = dma.vmem_to_hbm [thread:$0]  %s2047, 128, %s2044, %s2033
        $region93: #{tpu_custom_call.1} parent=80 // pred_fallthru
          _
      $region81: #{tpu_custom_call.1} parent=5 // pred_fallthru
        _
      %p2050 = scmp.le.s32.totalorder 2, %s18
      // Predicated region
      $region94: #{tpu_custom_call.1} parent=5 // pred_check
        %p2051 = pneg %p2050
      $region95: #{tpu_custom_call.1} parent=5 // pred_check_branch
        %2053 = sbr.rel (%p2051) target = $region97
      $region96: #{tpu_custom_call.1} parent=5 // pred_region
        %s2054 = ssub.s32 %s18, 2
        // Predicated region
        $region98: #{tpu_custom_call.1} parent=96 // pred_check
          %p2055 = pneg %p183
        $region99: #{tpu_custom_call.1} parent=96 // pred_check_branch
          %2057 = sbr.rel (%p2055) target = $region101
        $region100: #{tpu_custom_call.1} parent=96 // pred_region
          %s2058 = sand.u32 %s168, 1
          %s2059 = scalar_lea.sflag [#allocation5], %s2058
          %s2060 = sand.u32 %s168, 1
          %s2061 = smul.addr %s2060, 8
          %s2062 = scalar_lea.vmem [#allocation6], %s2061
          %2063 = dma.done %s2059, 128
        $region101: #{tpu_custom_call.1} parent=96 // pred_fallthru
          _
      $region97: #{tpu_custom_call.1} parent=5 // pred_fallthru
        _
    $region6: #{tpu_custom_call.1} parent=1 // loop_footer
      %s22 = sadd.s32 1, %s18
    $region7: #{tpu_custom_call.1} parent=1 // loop_footer_branch
      %17 = sbr.rel target = $region3
    $region8: #{tpu_custom_call.1} parent=1 // loop_exit
      _
    %2064 = vsyncpa [#allocation4], 1
    %s2065 = scalar_lea.sflag [#allocation4], 1
    %2066 = vsyncpa %s2065, 1
    %2067 = vsyncpa [#allocation5], 1
    %s2068 = scalar_lea.sflag [#allocation5], 1
    %2069 = vsyncpa %s2068, 1

</llo_original>
